<compile_context>
chip_gen: v7x
topology: tpu7x:2x2x1
jax: 0.10.0
libtpu: 0.0.40
codegen_flags: <defaults>
</compile_context>

<pallas_src>
import jax
import jax.numpy as jnp
from jax.experimental import pallas as pl
from jax.experimental.pallas import tpu as pltpu


def _disc_kernel(x_ref, w1_ref, b1_ref, w2_ref, b2_ref, w3t_ref, b3_ref, out_ref):
    # x_ref:   (TB, F)    bf16
    # w1_ref:  (F, 512)   bf16   b1_ref: (1, 512) f32
    # w2_ref:  (512, 256) bf16   b2_ref: (1, 256) f32
    # w3t_ref: (1, 256)   f32    b3_ref: (1, 1)   f32
    x = x_ref[...]

    # Layer 1: bf16 MXU matmul, f32 accumulate; LeakyReLU(0.2) in f32 on VPU.
    h1 = jnp.dot(x, w1_ref[...], preferred_element_type=jnp.float32) + b1_ref[...]
    h1 = jnp.maximum(h1, 0.2 * h1)

    # Layer 2.
    h2 = jnp.dot(h1.astype(jnp.bfloat16), w2_ref[...],
                 preferred_element_type=jnp.float32) + b2_ref[...]
    h2 = jnp.maximum(h2, 0.2 * h2)

    # Layer 3 (out_features=1): lane reduction on VPU/XLU instead of an
    # almost-empty MXU matmul.
    out = jnp.sum(h2 * w3t_ref[...], axis=-1, keepdims=True) + b3_ref[...]
    out_ref[...] = out.astype(out_ref.dtype)


def discriminator_forward(img, params, *, tile_b=128):
    """img: (B, C, H, W) float32 -> validity (B, 1) float32."""
    w1, b1, w2, b2, w3, b3 = params
    B = img.shape[0]
    F = w1.shape[0]

    # Flatten NCHW row-major (matches torch .view(B, -1)) and feed bf16 to the MXU.
    x = img.reshape(B, -1).astype(jnp.bfloat16)

    # Pad the batch up to a full MXU-friendly tile.
    b_pad = pl.cdiv(B, tile_b) * tile_b
    if b_pad != B:
        x = jnp.pad(x, ((0, b_pad - B), (0, 0)))

    w3t = w3.reshape(1, -1)  # (1, 256) row for the lane reduction

    def resident(shape):
        # Weights/biases: same block every grid step -> stay resident in VMEM.
        return pl.BlockSpec(shape, lambda i: (0, 0))

    out = pl.pallas_call(
        _disc_kernel,
        out_shape=jax.ShapeDtypeStruct((b_pad, 1), jnp.float32),
        grid=(b_pad // tile_b,),
        in_specs=[
            pl.BlockSpec((tile_b, F), lambda i: (i, 0)),   # activations: pipelined
            resident(w1.shape),
            resident(b1.shape),
            resident(w2.shape),
            resident(b2.shape),
            resident(w3t.shape),
            resident(b3.shape),
        ],
        out_specs=pl.BlockSpec((tile_b, 1), lambda i: (i, 0)),
        compiler_params=pltpu.CompilerParams(
            dimension_semantics=("parallel",),   # shards batch tiles across TCs (v7x)
            vmem_limit_bytes=32 * 1024 * 1024,
        ),
    )(x, w1, b1, w2, b2, w3t, b3)

    return out[:B]


def init_params(key, in_features):
    """Deterministic init mimicking nn.Linear's U(-1/sqrt(fan_in), 1/sqrt(fan_in)).

    w1/w2 stored in bf16 (MXU operands); biases and the width-1 head in f32.
    """
    dims = [(in_features, 512), (512, 256), (256, 1)]
    params = []
    for i, (fan_in, fan_out) in enumerate(dims):
        kw, kb, key = jax.random.split(jax.random.fold_in(key, i), 3)
        bound = 1.0 / (fan_in ** 0.5)
        w = jax.random.uniform(kw, (fan_in, fan_out), jnp.float32, -bound, bound)
        b = jax.random.uniform(kb, (1, fan_out), jnp.float32, -bound, bound)
        if fan_out > 1:
            w = w.astype(jnp.bfloat16)
        params.extend([w, b])
    return tuple(params)


if __name__ == "__main__":
    key = jax.random.PRNGKey(0)
    B, C, IMG = 2, 1, 16                          # img_size = 16 -> 256 input features
    img = jax.random.normal(jax.random.fold_in(key, 100), (B, C, IMG, IMG), jnp.float32)

    params = init_params(key, IMG * IMG)
    validity = discriminator_forward(img, params)
    jax.block_until_ready(validity)

    # Pure-JAX reference mirroring the kernel's dtype choices (bf16 MXU inputs,
    # f32 accumulation / activations).
    w1, b1, w2, b2, w3, b3 = params
    x = img.reshape(B, -1).astype(jnp.bfloat16)
    h1 = jnp.dot(x, w1, preferred_element_type=jnp.float32) + b1
    h1 = jnp.maximum(h1, 0.2 * h1)
    h2 = jnp.dot(h1.astype(jnp.bfloat16), w2, preferred_element_type=jnp.float32) + b2
    h2 = jnp.maximum(h2, 0.2 * h2)
    ref = jnp.sum(h2 * w3.reshape(1, -1), axis=-1, keepdims=True) + b3

    assert validity.shape == (B, 1)
    assert validity.dtype == jnp.float32
    assert jnp.allclose(validity, ref, atol=2e-3, rtol=2e-3), (
        f"max abs err {jnp.max(jnp.abs(validity - ref))}")

    print("KERNEL_OK")
</pallas_src>

<mosaic_0001>
module attributes {stable_mosaic.version = 11 : i64} {
  func.func @_disc_kernel(%arg0: i32, %arg1: memref<128x256xbf16, #tpu.memory_space<vmem>>, %arg2: memref<256x512xbf16, #tpu.memory_space<vmem>>, %arg3: memref<1x512xf32, #tpu.memory_space<vmem>>, %arg4: memref<512x256xbf16, #tpu.memory_space<vmem>>, %arg5: memref<1x256xf32, #tpu.memory_space<vmem>>, %arg6: memref<1x256xf32, #tpu.memory_space<vmem>>, %arg7: memref<1x1xf32, #tpu.memory_space<vmem>>, %arg8: memref<128x1xf32, #tpu.memory_space<vmem>>) attributes {dimension_semantics = [#tpu.dimension_semantics<parallel>], iteration_bounds = array<i64: 1>, scalar_prefetch = 0 : i64, scratch_operands = 0 : i64, tpu.core_type = #tpu.core_type<tc>, window_params = [{transform_indices = @transform_0, window_bounds = array<i64: 128, 256>}, {pipeline_mode = #tpu.pipeline_mode<synchronous>, transform_indices = @transform_1, window_bounds = array<i64: 256, 512>}, {pipeline_mode = #tpu.pipeline_mode<synchronous>, transform_indices = @transform_2, window_bounds = array<i64: 1, 512>}, {pipeline_mode = #tpu.pipeline_mode<synchronous>, transform_indices = @transform_3, window_bounds = array<i64: 512, 256>}, {pipeline_mode = #tpu.pipeline_mode<synchronous>, transform_indices = @transform_4, window_bounds = array<i64: 1, 256>}, {pipeline_mode = #tpu.pipeline_mode<synchronous>, transform_indices = @transform_5, window_bounds = array<i64: 1, 256>}, {pipeline_mode = #tpu.pipeline_mode<synchronous>, transform_indices = @transform_6, window_bounds = array<i64: 1, 1>}, {transform_indices = @transform_7, window_bounds = array<i64: 128, 1>}]} {
    %c0 = arith.constant 0 : index
    %c0_0 = arith.constant 0 : index
    %0 = vector.load %arg1[%c0, %c0_0] : memref<128x256xbf16, #tpu.memory_space<vmem>>, vector<128x256xbf16>
    %c0_1 = arith.constant 0 : index
    %c0_2 = arith.constant 0 : index
    %1 = vector.load %arg2[%c0_1, %c0_2] : memref<256x512xbf16, #tpu.memory_space<vmem>>, vector<256x512xbf16>
    %cst = arith.constant dense<0.000000e+00> : vector<128x512xf32>
    %2 = tpu.matmul %0, %1, %cst {dimension_numbers = #tpu.dot_dimension_numbers<[1], [0], [0], [1], [0, 0, 1, 1], [], []>} : vector<128x256xbf16>, vector<256x512xbf16>, vector<128x512xf32> -> vector<128x512xf32>
    %c0_3 = arith.constant 0 : index
    %c0_4 = arith.constant 0 : index
    %3 = vector.load %arg3[%c0_3, %c0_4] : memref<1x512xf32, #tpu.memory_space<vmem>>, vector<1x512xf32>
    %4 = vector.broadcast %3 : vector<1x512xf32> to vector<128x512xf32>
    %5 = arith.addf %2, %4 : vector<128x512xf32>
    %cst_5 = arith.constant 2.000000e-01 : f32
    %6 = vector.broadcast %cst_5 : f32 to vector<128x512xf32>
    %7 = arith.mulf %6, %5 : vector<128x512xf32>
    %8 = arith.maximumf %5, %7 : vector<128x512xf32>
    %9 = arith.truncf %8 : vector<128x512xf32> to vector<128x512xbf16>
    %c0_6 = arith.constant 0 : index
    %c0_7 = arith.constant 0 : index
    %10 = vector.load %arg4[%c0_6, %c0_7] : memref<512x256xbf16, #tpu.memory_space<vmem>>, vector<512x256xbf16>
    %cst_8 = arith.constant dense<0.000000e+00> : vector<128x256xf32>
    %11 = tpu.matmul %9, %10, %cst_8 {dimension_numbers = #tpu.dot_dimension_numbers<[1], [0], [0], [1], [0, 0, 1, 1], [], []>} : vector<128x512xbf16>, vector<512x256xbf16>, vector<128x256xf32> -> vector<128x256xf32>
    %c0_9 = arith.constant 0 : index
    %c0_10 = arith.constant 0 : index
    %12 = vector.load %arg5[%c0_9, %c0_10] : memref<1x256xf32, #tpu.memory_space<vmem>>, vector<1x256xf32>
    %13 = vector.broadcast %12 : vector<1x256xf32> to vector<128x256xf32>
    %14 = arith.addf %11, %13 : vector<128x256xf32>
    %cst_11 = arith.constant 2.000000e-01 : f32
    %15 = vector.broadcast %cst_11 : f32 to vector<128x256xf32>
    %16 = arith.mulf %15, %14 : vector<128x256xf32>
    %17 = arith.maximumf %14, %16 : vector<128x256xf32>
    %c0_12 = arith.constant 0 : index
    %c0_13 = arith.constant 0 : index
    %18 = vector.load %arg6[%c0_12, %c0_13] : memref<1x256xf32, #tpu.memory_space<vmem>>, vector<1x256xf32>
    %19 = vector.broadcast %18 : vector<1x256xf32> to vector<128x256xf32>
    %20 = arith.mulf %17, %19 : vector<128x256xf32>
    %cst_14 = arith.constant dense<0.000000e+00> : vector<128xf32>
    %21 = vector.multi_reduction <add>, %20, %cst_14 [1] : vector<128x256xf32> to vector<128xf32>
    %22 = vector.shape_cast %21 : vector<128xf32> to vector<128x1xf32>
    %c0_15 = arith.constant 0 : index
    %c0_16 = arith.constant 0 : index
    %23 = vector.load %arg7[%c0_15, %c0_16] : memref<1x1xf32, #tpu.memory_space<vmem>>, vector<1x1xf32>
    %24 = vector.broadcast %23 : vector<1x1xf32> to vector<128x1xf32>
    %25 = arith.addf %22, %24 : vector<128x1xf32>
    %c0_17 = arith.constant 0 : index
    %c0_18 = arith.constant 0 : index
    %26 = vector.load %arg8[%c0_17, %c0_18] : memref<128x1xf32, #tpu.memory_space<vmem>>, vector<128x1xf32>
    tpu.vector_store %arg8[%c0_17, %c0_18], %25 {strides = array<i32>} : memref<128x1xf32, #tpu.memory_space<vmem>>, vector<128x1xf32>,
    return
  }
  func.func @transform_0(%arg0: i32) -> (i32, i32) {
    %c0_i32 = arith.constant 0 : i32
    %c0_i32_0 = arith.constant 0 : i32
    return %arg0, %c0_i32 : i32, i32
  }
  func.func @transform_1(%arg0: i32) -> (i32, i32) {
    %c0_i32 = arith.constant 0 : i32
    %c0_i32_0 = arith.constant 0 : i32
    %c0_i32_1 = arith.constant 0 : i32
    return %c0_i32, %c0_i32_0 : i32, i32
  }
  func.func @transform_2(%arg0: i32) -> (i32, i32) {
    %c0_i32 = arith.constant 0 : i32
    %c0_i32_0 = arith.constant 0 : i32
    %c0_i32_1 = arith.constant 0 : i32
    return %c0_i32, %c0_i32_0 : i32, i32
  }
  func.func @transform_3(%arg0: i32) -> (i32, i32) {
    %c0_i32 = arith.constant 0 : i32
    %c0_i32_0 = arith.constant 0 : i32
    %c0_i32_1 = arith.constant 0 : i32
    return %c0_i32, %c0_i32_0 : i32, i32
  }
  func.func @transform_4(%arg0: i32) -> (i32, i32) {
    %c0_i32 = arith.constant 0 : i32
    %c0_i32_0 = arith.constant 0 : i32
    %c0_i32_1 = arith.constant 0 : i32
    return %c0_i32, %c0_i32_0 : i32, i32
  }
  func.func @transform_5(%arg0: i32) -> (i32, i32) {
    %c0_i32 = arith.constant 0 : i32
    %c0_i32_0 = arith.constant 0 : i32
    %c0_i32_1 = arith.constant 0 : i32
    return %c0_i32, %c0_i32_0 : i32, i32
  }
  func.func @transform_6(%arg0: i32) -> (i32, i32) {
    %c0_i32 = arith.constant 0 : i32
    %c0_i32_0 = arith.constant 0 : i32
    %c0_i32_1 = arith.constant 0 : i32
    return %c0_i32, %c0_i32_0 : i32, i32
  }
  func.func @transform_7(%arg0: i32) -> (i32, i32) {
    %c0_i32 = arith.constant 0 : i32
    %c0_i32_0 = arith.constant 0 : i32
    return %arg0, %c0_i32 : i32, i32
  }
}

</mosaic_0001>

<llo_original>
// kernel: tpu_custom_call.1
$region0: #{tpu_custom_call.1}
  #allocation0 [shape = 'u32[]', space=smem, size = 0x4, offset = 0x4, fixed_abs, tag = 'smem constant byte address 0x4 - core index']
  #allocation1 [shape = 'u32[144,128]{1,0:T(1,128)}', space=vmem, size = 0x12000, scoped, tag = 'internal scratch']
  #allocation2 [shape = 'f32[1,1]{1,0:T(1,128)S(1)}', space=vmem, size = 0x200, scoped, tag = 'scoped memory for tpu_custom_call.1']
  %s0 = inlined_call_operand.hbm [shape: bf16[128,256], index: 0, kind: input, shape index: {}]
  %s1 = inlined_call_operand.hbm [shape: bf16[256,512], index: 1, kind: input, shape index: {}]
  %s2 = inlined_call_operand.vmem [shape: f32[1,512], index: 2, kind: input, shape index: {}]
  %s3 = inlined_call_operand.hbm [shape: bf16[512,256], index: 3, kind: input, shape index: {}]
  %s4 = inlined_call_operand.vmem [shape: f32[1,256], index: 4, kind: input, shape index: {}]
  %s5 = inlined_call_operand.vmem [shape: f32[1,256], index: 5, kind: input, shape index: {}]
  %s6 = inlined_call_operand.<no memory space> [shape: f32[1,1], index: 6, kind: input, shape index: {}]
  %s7 = inlined_call_operand.vmem [shape: f32[128,1], index: 7, kind: output, shape index: {}]
  %s8 = sld [smem:[#allocation0]]
  $region50: #{tpu_custom_call.1} parent=0
    _
  %s10 = ssub.s32 1, %s8
  %s11 = scalar_select 0, %s10, %s8
  %v12 = vstv %s6
  %13 = vst [vmem:[#allocation2] sm:$0x1] %v12
  $region1: #{tpu_custom_call.1} parent=0
    #allocation3 [shape = 'u8[65536]{0}', space=vmem, size = 0x10000, scoped, tag = 'input window, operand 0, single buffered']
    #allocation4 [shape = 's32[1]{0}', space=sflag, size = 0x4, scoped, tag = 'scoped memory for tpu_custom_call.1']
    #allocation5 [shape = 'u8[262144]{0}', space=vmem, size = 0x40000, scoped, tag = 'input window, operand 1, single buffered']
    #allocation6 [shape = 's32[1]{0}', space=sflag, size = 0x4, scoped, tag = 'scoped memory for tpu_custom_call.1']
    #allocation7 [shape = 'u8[262144]{0}', space=vmem, size = 0x40000, scoped, tag = 'input window, operand 3, single buffered']
    %14 = vsyncpa [#allocation4], 0
    %15 = vsyncpa [#allocation6], 0
    // Predicated region
    $region2: #{tpu_custom_call.1} parent=1 // pred_check
      _
    $region3: #{tpu_custom_call.1} parent=1 // pred_check_branch
      %17 = sbr.rel (0) target = $region5
    $region4: #{tpu_custom_call.1} parent=1 // pred_region
      %s19 = ssub.s32 2048, 2048
      %20 = vsyncadd [#allocation4], %s19
      %s21 = sshll.u32 [#allocation3], 4
      %s22 = int_to_ptr.vmem [resolvable:$true] %s21
      %27 = dma.hbm_to_vmem [thread:$0]  %s0, 2048, %s22, [#allocation4], 128, 128, 8
    $region5: #{tpu_custom_call.1} parent=1 // pred_fallthru
      _
    // Predicated region
    $region6: #{tpu_custom_call.1} parent=1 // pred_check
      _
    $region7: #{tpu_custom_call.1} parent=1 // pred_check_branch
      %29 = sbr.rel (0) target = $region9
    $region8: #{tpu_custom_call.1} parent=1 // pred_region
      %s31 = ssub.s32 8192, 8192
      %32 = vsyncadd [#allocation6], %s31
      %s33 = sshll.u32 [#allocation5], 4
      %s34 = int_to_ptr.vmem [resolvable:$true] %s33
      %39 = dma.hbm_to_vmem [thread:$0]  %s1, 8192, %s34, [#allocation6], 256, 256, 16
    $region9: #{tpu_custom_call.1} parent=1 // pred_fallthru
      _
    // Predicated region
    $region10: #{tpu_custom_call.1} parent=1 // pred_check
      _
    $region11: #{tpu_custom_call.1} parent=1 // pred_check_branch
      %41 = sbr.rel (0) target = $region13
    $region12: #{tpu_custom_call.1} parent=1 // pred_region
      _
    $region13: #{tpu_custom_call.1} parent=1 // pred_fallthru
      _
    // Predicated region
    $region14: #{tpu_custom_call.1} parent=1 // pred_check
      _
    $region15: #{tpu_custom_call.1} parent=1 // pred_check_branch
      %43 = sbr.rel (0) target = $region17
    $region16: #{tpu_custom_call.1} parent=1 // pred_region
      %s45 = ssub.s32 8192, 8192
      %46 = vsyncadd [#allocation6], %s45
      %s47 = sshll.u32 [#allocation7], 4
      %s48 = int_to_ptr.vmem [resolvable:$true] %s47
      %53 = dma.hbm_to_vmem [thread:$0]  %s3, 8192, %s48, [#allocation6], 128, 128, 8
    $region17: #{tpu_custom_call.1} parent=1 // pred_fallthru
      _
    // Predicated region
    $region18: #{tpu_custom_call.1} parent=1 // pred_check
      _
    $region19: #{tpu_custom_call.1} parent=1 // pred_check_branch
      %55 = sbr.rel (0) target = $region21
    $region20: #{tpu_custom_call.1} parent=1 // pred_region
      _
    $region21: #{tpu_custom_call.1} parent=1 // pred_fallthru
      _
    // Predicated region
    $region22: #{tpu_custom_call.1} parent=1 // pred_check
      _
    $region23: #{tpu_custom_call.1} parent=1 // pred_check_branch
      %57 = sbr.rel (0) target = $region25
    $region24: #{tpu_custom_call.1} parent=1 // pred_region
      _
    $region25: #{tpu_custom_call.1} parent=1 // pred_fallthru
      _
    // Predicated region
    $region26: #{tpu_custom_call.1} parent=1 // pred_check
      _
    $region27: #{tpu_custom_call.1} parent=1 // pred_check_branch
      %59 = sbr.rel (0) target = $region29
    $region28: #{tpu_custom_call.1} parent=1 // pred_region
      _
    $region29: #{tpu_custom_call.1} parent=1 // pred_fallthru
      _
    // Predicated region
    $region30: #{tpu_custom_call.1} parent=1 // pred_check
      _
    $region31: #{tpu_custom_call.1} parent=1 // pred_check_branch
      %61 = sbr.rel (0) target = $region33
    $region32: #{tpu_custom_call.1} parent=1 // pred_region
      %62 = dma.done [#allocation4], 2048
    $region33: #{tpu_custom_call.1} parent=1 // pred_fallthru
      _
    // Predicated region
    $region34: #{tpu_custom_call.1} parent=1 // pred_check
      _
    $region35: #{tpu_custom_call.1} parent=1 // pred_check_branch
      %64 = sbr.rel (0) target = $region37
    $region36: #{tpu_custom_call.1} parent=1 // pred_region
      %65 = dma.done [#allocation6], 8192
    $region37: #{tpu_custom_call.1} parent=1 // pred_fallthru
      _
    // Predicated region
    $region38: #{tpu_custom_call.1} parent=1 // pred_check
      _
    $region39: #{tpu_custom_call.1} parent=1 // pred_check_branch
      %67 = sbr.rel (0) target = $region41
    $region40: #{tpu_custom_call.1} parent=1 // pred_region
      %68 = dma.done [#allocation6], 8192
    $region41: #{tpu_custom_call.1} parent=1 // pred_fallthru
      _
    %v69 = vld [vmem:[#allocation3] sm:$0xff]
    %v70 = vld [vmem:[#allocation3 + $0x8] sm:$0xff]
    %v71 = vld [vmem:[#allocation3 + $0x10] sm:$0xff]
    %v72 = vld [vmem:[#allocation3 + $0x18] sm:$0xff]
    %v73 = vld [vmem:[#allocation3 + $0x20] sm:$0xff]
    %v74 = vld [vmem:[#allocation3 + $0x28] sm:$0xff]
    %v75 = vld [vmem:[#allocation3 + $0x30] sm:$0xff]
    %v76 = vld [vmem:[#allocation3 + $0x38] sm:$0xff]
    %v77 = vld [vmem:[#allocation3 + $0x40] sm:$0xff]
    %v78 = vld [vmem:[#allocation3 + $0x48] sm:$0xff]
    %v79 = vld [vmem:[#allocation3 + $0x50] sm:$0xff]
    %v80 = vld [vmem:[#allocation3 + $0x58] sm:$0xff]
    %v81 = vld [vmem:[#allocation3 + $0x60] sm:$0xff]
    %v82 = vld [vmem:[#allocation3 + $0x68] sm:$0xff]
    %v83 = vld [vmem:[#allocation3 + $0x70] sm:$0xff]
    %v84 = vld [vmem:[#allocation3 + $0x78] sm:$0xff]
    %v85 = vld [vmem:[#allocation5] sm:$0xff]
    %v86 = vld [vmem:[#allocation5 + $0x8] sm:$0xff]
    %v87 = vld [vmem:[#allocation5 + $0x10] sm:$0xff]
    %v88 = vld [vmem:[#allocation5 + $0x18] sm:$0xff]
    %v89 = vld [vmem:[#allocation5 + $0x20] sm:$0xff]
    %v90 = vld [vmem:[#allocation5 + $0x28] sm:$0xff]
    %v91 = vld [vmem:[#allocation5 + $0x30] sm:$0xff]
    %v92 = vld [vmem:[#allocation5 + $0x38] sm:$0xff]
    %v93 = vld [vmem:[#allocation5 + $0x40] sm:$0xff]
    %v94 = vld [vmem:[#allocation5 + $0x48] sm:$0xff]
    %v95 = vld [vmem:[#allocation5 + $0x50] sm:$0xff]
    %v96 = vld [vmem:[#allocation5 + $0x58] sm:$0xff]
    %v97 = vld [vmem:[#allocation5 + $0x60] sm:$0xff]
    %v98 = vld [vmem:[#allocation5 + $0x68] sm:$0xff]
    %v99 = vld [vmem:[#allocation5 + $0x70] sm:$0xff]
    %v100 = vld [vmem:[#allocation5 + $0x78] sm:$0xff]
    %v101 = vld [vmem:[#allocation5 + $0x80] sm:$0xff]
    %v102 = vld [vmem:[#allocation5 + $0x88] sm:$0xff]
    %v103 = vld [vmem:[#allocation5 + $0x90] sm:$0xff]
    %v104 = vld [vmem:[#allocation5 + $0x98] sm:$0xff]
    %v105 = vld [vmem:[#allocation5 + $0xa0] sm:$0xff]
    %v106 = vld [vmem:[#allocation5 + $0xa8] sm:$0xff]
    %v107 = vld [vmem:[#allocation5 + $0xb0] sm:$0xff]
    %v108 = vld [vmem:[#allocation5 + $0xb8] sm:$0xff]
    %v109 = vld [vmem:[#allocation5 + $0xc0] sm:$0xff]
    %v110 = vld [vmem:[#allocation5 + $0xc8] sm:$0xff]
    %v111 = vld [vmem:[#allocation5 + $0xd0] sm:$0xff]
    %v112 = vld [vmem:[#allocation5 + $0xd8] sm:$0xff]
    %v113 = vld [vmem:[#allocation5 + $0xe0] sm:$0xff]
    %v114 = vld [vmem:[#allocation5 + $0xe8] sm:$0xff]
    %v115 = vld [vmem:[#allocation5 + $0xf0] sm:$0xff]
    %v116 = vld [vmem:[#allocation5 + $0xf8] sm:$0xff]
    %v117 = vld [vmem:[#allocation5 + $0x100] sm:$0xff]
    %v118 = vld [vmem:[#allocation5 + $0x108] sm:$0xff]
    %v119 = vld [vmem:[#allocation5 + $0x110] sm:$0xff]
    %v120 = vld [vmem:[#allocation5 + $0x118] sm:$0xff]
    %v121 = vld [vmem:[#allocation5 + $0x120] sm:$0xff]
    %v122 = vld [vmem:[#allocation5 + $0x128] sm:$0xff]
    %v123 = vld [vmem:[#allocation5 + $0x130] sm:$0xff]
    %v124 = vld [vmem:[#allocation5 + $0x138] sm:$0xff]
    %v125 = vld [vmem:[#allocation5 + $0x140] sm:$0xff]
    %v126 = vld [vmem:[#allocation5 + $0x148] sm:$0xff]
    %v127 = vld [vmem:[#allocation5 + $0x150] sm:$0xff]
    %v128 = vld [vmem:[#allocation5 + $0x158] sm:$0xff]
    %v129 = vld [vmem:[#allocation5 + $0x160] sm:$0xff]
    %v130 = vld [vmem:[#allocation5 + $0x168] sm:$0xff]
    %v131 = vld [vmem:[#allocation5 + $0x170] sm:$0xff]
    %v132 = vld [vmem:[#allocation5 + $0x178] sm:$0xff]
    %v133 = vld [vmem:[#allocation5 + $0x180] sm:$0xff]
    %v134 = vld [vmem:[#allocation5 + $0x188] sm:$0xff]
    %v135 = vld [vmem:[#allocation5 + $0x190] sm:$0xff]
    %v136 = vld [vmem:[#allocation5 + $0x198] sm:$0xff]
    %v137 = vld [vmem:[#allocation5 + $0x1a0] sm:$0xff]
    %v138 = vld [vmem:[#allocation5 + $0x1a8] sm:$0xff]
    %v139 = vld [vmem:[#allocation5 + $0x1b0] sm:$0xff]
    %v140 = vld [vmem:[#allocation5 + $0x1b8] sm:$0xff]
    %v141 = vld [vmem:[#allocation5 + $0x1c0] sm:$0xff]
    %v142 = vld [vmem:[#allocation5 + $0x1c8] sm:$0xff]
    %v143 = vld [vmem:[#allocation5 + $0x1d0] sm:$0xff]
    %v144 = vld [vmem:[#allocation5 + $0x1d8] sm:$0xff]
    %v145 = vld [vmem:[#allocation5 + $0x1e0] sm:$0xff]
    %v146 = vld [vmem:[#allocation5 + $0x1e8] sm:$0xff]
    %v147 = vld [vmem:[#allocation5 + $0x1f0] sm:$0xff]
    %v148 = vld [vmem:[#allocation5 + $0x1f8] sm:$0xff]
    %v149 = vld [vmem:[%s2] sm:$0xf]
    %v151 = vlaneseq
    %v152 = vshrl.u32 %v151, 7
    %v153 = vsub.s32 0, %v152
    %v154 = vrot.slane %v149, %v153
    %v155 = vlaneseq
    %v156 = vshrl.u32 %v155, 7
    %v157 = vsub.s32 1, %v156
    %v158 = vrot.slane %v149, %v157
    %v159 = vlaneseq
    %v160 = vshrl.u32 %v159, 7
    %v161 = vsub.s32 2, %v160
    %v162 = vrot.slane %v149, %v161
    %v163 = vlaneseq
    %v164 = vshrl.u32 %v163, 7
    %v165 = vsub.s32 3, %v164
    %v166 = vrot.slane %v149, %v165
    %v187 = vunpack.c.l.b16 %v69
    %v188 = vunpack.c.h.b16 %v69
    %v189 = vunpack.c.l.b16 %v70
    %v190 = vunpack.c.h.b16 %v70
    %v191 = vunpack.c.l.b16 %v71
    %v192 = vunpack.c.h.b16 %v71
    %v193 = vunpack.c.l.b16 %v72
    %v194 = vunpack.c.h.b16 %v72
    %v195 = vunpack.c.l.b16 %v73
    %v196 = vunpack.c.h.b16 %v73
    %v197 = vunpack.c.l.b16 %v74
    %v198 = vunpack.c.h.b16 %v74
    %v199 = vunpack.c.l.b16 %v75
    %v200 = vunpack.c.h.b16 %v75
    %v201 = vunpack.c.l.b16 %v76
    %v202 = vunpack.c.h.b16 %v76
    %v203 = vunpack.c.l.b16 %v77
    %v204 = vunpack.c.h.b16 %v77
    %v205 = vunpack.c.l.b16 %v78
    %v206 = vunpack.c.h.b16 %v78
    %v207 = vunpack.c.l.b16 %v79
    %v208 = vunpack.c.h.b16 %v79
    %v209 = vunpack.c.l.b16 %v80
    %v210 = vunpack.c.h.b16 %v80
    %v211 = vunpack.c.l.b16 %v81
    %v212 = vunpack.c.h.b16 %v81
    %v213 = vunpack.c.l.b16 %v82
    %v214 = vunpack.c.h.b16 %v82
    %v215 = vunpack.c.l.b16 %v83
    %v216 = vunpack.c.h.b16 %v83
    %v217 = vunpack.c.l.b16 %v84
    %v218 = vunpack.c.h.b16 %v84
    %v219 = vpack.c.b16 %v189, %v187
    %v220 = vpack.c.b16 %v190, %v188
    %v221 = vpack.c.b16 %v193, %v191
    %v222 = vpack.c.b16 %v194, %v192
    %v223 = vpack.c.b16 %v197, %v195
    %v224 = vpack.c.b16 %v198, %v196
    %v225 = vpack.c.b16 %v201, %v199
    %v226 = vpack.c.b16 %v202, %v200
    %v227 = vpack.c.b16 %v205, %v203
    %v228 = vpack.c.b16 %v206, %v204
    %v229 = vpack.c.b16 %v209, %v207
    %v230 = vpack.c.b16 %v210, %v208
    %v231 = vpack.c.b16 %v213, %v211
    %v232 = vpack.c.b16 %v214, %v212
    %v233 = vpack.c.b16 %v217, %v215
    %v234 = vpack.c.b16 %v218, %v216
    %v315 = vunpack.c.l.b16 %v85
    %v316 = vunpack.c.h.b16 %v85
    %v317 = vunpack.c.l.b16 %v86
    %v318 = vunpack.c.h.b16 %v86
    %v319 = vunpack.c.l.b16 %v87
    %v320 = vunpack.c.h.b16 %v87
    %v321 = vunpack.c.l.b16 %v88
    %v322 = vunpack.c.h.b16 %v88
    %v323 = vunpack.c.l.b16 %v89
    %v324 = vunpack.c.h.b16 %v89
    %v325 = vunpack.c.l.b16 %v90
    %v326 = vunpack.c.h.b16 %v90
    %v327 = vunpack.c.l.b16 %v91
    %v328 = vunpack.c.h.b16 %v91
    %v329 = vunpack.c.l.b16 %v92
    %v330 = vunpack.c.h.b16 %v92
    %v331 = vunpack.c.l.b16 %v93
    %v332 = vunpack.c.h.b16 %v93
    %v333 = vunpack.c.l.b16 %v94
    %v334 = vunpack.c.h.b16 %v94
    %v335 = vunpack.c.l.b16 %v95
    %v336 = vunpack.c.h.b16 %v95
    %v337 = vunpack.c.l.b16 %v96
    %v338 = vunpack.c.h.b16 %v96
    %v339 = vunpack.c.l.b16 %v97
    %v340 = vunpack.c.h.b16 %v97
    %v341 = vunpack.c.l.b16 %v98
    %v342 = vunpack.c.h.b16 %v98
    %v343 = vunpack.c.l.b16 %v99
    %v344 = vunpack.c.h.b16 %v99
    %v345 = vunpack.c.l.b16 %v100
    %v346 = vunpack.c.h.b16 %v100
    %v347 = vunpack.c.l.b16 %v101
    %v348 = vunpack.c.h.b16 %v101
    %v349 = vunpack.c.l.b16 %v102
    %v350 = vunpack.c.h.b16 %v102
    %v351 = vunpack.c.l.b16 %v103
    %v352 = vunpack.c.h.b16 %v103
    %v353 = vunpack.c.l.b16 %v104
    %v354 = vunpack.c.h.b16 %v104
    %v355 = vunpack.c.l.b16 %v105
    %v356 = vunpack.c.h.b16 %v105
    %v357 = vunpack.c.l.b16 %v106
    %v358 = vunpack.c.h.b16 %v106
    %v359 = vunpack.c.l.b16 %v107
    %v360 = vunpack.c.h.b16 %v107
    %v361 = vunpack.c.l.b16 %v108
    %v362 = vunpack.c.h.b16 %v108
    %v363 = vunpack.c.l.b16 %v109
    %v364 = vunpack.c.h.b16 %v109
    %v365 = vunpack.c.l.b16 %v110
    %v366 = vunpack.c.h.b16 %v110
    %v367 = vunpack.c.l.b16 %v111
    %v368 = vunpack.c.h.b16 %v111
    %v369 = vunpack.c.l.b16 %v112
    %v370 = vunpack.c.h.b16 %v112
    %v371 = vunpack.c.l.b16 %v113
    %v372 = vunpack.c.h.b16 %v113
    %v373 = vunpack.c.l.b16 %v114
    %v374 = vunpack.c.h.b16 %v114
    %v375 = vunpack.c.l.b16 %v115
    %v376 = vunpack.c.h.b16 %v115
    %v377 = vunpack.c.l.b16 %v116
    %v378 = vunpack.c.h.b16 %v116
    %v379 = vunpack.c.l.b16 %v117
    %v380 = vunpack.c.h.b16 %v117
    %v381 = vunpack.c.l.b16 %v118
    %v382 = vunpack.c.h.b16 %v118
    %v383 = vunpack.c.l.b16 %v119
    %v384 = vunpack.c.h.b16 %v119
    %v385 = vunpack.c.l.b16 %v120
    %v386 = vunpack.c.h.b16 %v120
    %v387 = vunpack.c.l.b16 %v121
    %v388 = vunpack.c.h.b16 %v121
    %v389 = vunpack.c.l.b16 %v122
    %v390 = vunpack.c.h.b16 %v122
    %v391 = vunpack.c.l.b16 %v123
    %v392 = vunpack.c.h.b16 %v123
    %v393 = vunpack.c.l.b16 %v124
    %v394 = vunpack.c.h.b16 %v124
    %v395 = vunpack.c.l.b16 %v125
    %v396 = vunpack.c.h.b16 %v125
    %v397 = vunpack.c.l.b16 %v126
    %v398 = vunpack.c.h.b16 %v126
    %v399 = vunpack.c.l.b16 %v127
    %v400 = vunpack.c.h.b16 %v127
    %v401 = vunpack.c.l.b16 %v128
    %v402 = vunpack.c.h.b16 %v128
    %v403 = vunpack.c.l.b16 %v129
    %v404 = vunpack.c.h.b16 %v129
    %v405 = vunpack.c.l.b16 %v130
    %v406 = vunpack.c.h.b16 %v130
    %v407 = vunpack.c.l.b16 %v131
    %v408 = vunpack.c.h.b16 %v131
    %v409 = vunpack.c.l.b16 %v132
    %v410 = vunpack.c.h.b16 %v132
    %v411 = vunpack.c.l.b16 %v133
    %v412 = vunpack.c.h.b16 %v133
    %v413 = vunpack.c.l.b16 %v134
    %v414 = vunpack.c.h.b16 %v134
    %v415 = vunpack.c.l.b16 %v135
    %v416 = vunpack.c.h.b16 %v135
    %v417 = vunpack.c.l.b16 %v136
    %v418 = vunpack.c.h.b16 %v136
    %v419 = vunpack.c.l.b16 %v137
    %v420 = vunpack.c.h.b16 %v137
    %v421 = vunpack.c.l.b16 %v138
    %v422 = vunpack.c.h.b16 %v138
    %v423 = vunpack.c.l.b16 %v139
    %v424 = vunpack.c.h.b16 %v139
    %v425 = vunpack.c.l.b16 %v140
    %v426 = vunpack.c.h.b16 %v140
    %v427 = vunpack.c.l.b16 %v141
    %v428 = vunpack.c.h.b16 %v141
    %v429 = vunpack.c.l.b16 %v142
    %v430 = vunpack.c.h.b16 %v142
    %v431 = vunpack.c.l.b16 %v143
    %v432 = vunpack.c.h.b16 %v143
    %v433 = vunpack.c.l.b16 %v144
    %v434 = vunpack.c.h.b16 %v144
    %v435 = vunpack.c.l.b16 %v145
    %v436 = vunpack.c.h.b16 %v145
    %v437 = vunpack.c.l.b16 %v146
    %v438 = vunpack.c.h.b16 %v146
    %v439 = vunpack.c.l.b16 %v147
    %v440 = vunpack.c.h.b16 %v147
    %v441 = vunpack.c.l.b16 %v148
    %v442 = vunpack.c.h.b16 %v148
    %v443 = vpack.c.b16 %v319, %v315
    %v444 = vpack.c.b16 %v320, %v316
    %v445 = vpack.c.b16 %v321, %v317
    %v446 = vpack.c.b16 %v322, %v318
    %v447 = vpack.c.b16 %v327, %v323
    %v448 = vpack.c.b16 %v328, %v324
    %v449 = vpack.c.b16 %v329, %v325
    %v450 = vpack.c.b16 %v330, %v326
    %v451 = vpack.c.b16 %v335, %v331
    %v452 = vpack.c.b16 %v336, %v332
    %v453 = vpack.c.b16 %v337, %v333
    %v454 = vpack.c.b16 %v338, %v334
    %v455 = vpack.c.b16 %v343, %v339
    %v456 = vpack.c.b16 %v344, %v340
    %v457 = vpack.c.b16 %v345, %v341
    %v458 = vpack.c.b16 %v346, %v342
    %v459 = vpack.c.b16 %v351, %v347
    %v460 = vpack.c.b16 %v352, %v348
    %v461 = vpack.c.b16 %v353, %v349
    %v462 = vpack.c.b16 %v354, %v350
    %v463 = vpack.c.b16 %v359, %v355
    %v464 = vpack.c.b16 %v360, %v356
    %v465 = vpack.c.b16 %v361, %v357
    %v466 = vpack.c.b16 %v362, %v358
    %v467 = vpack.c.b16 %v367, %v363
    %v468 = vpack.c.b16 %v368, %v364
    %v469 = vpack.c.b16 %v369, %v365
    %v470 = vpack.c.b16 %v370, %v366
    %v471 = vpack.c.b16 %v375, %v371
    %v472 = vpack.c.b16 %v376, %v372
    %v473 = vpack.c.b16 %v377, %v373
    %v474 = vpack.c.b16 %v378, %v374
    %v475 = vpack.c.b16 %v383, %v379
    %v476 = vpack.c.b16 %v384, %v380
    %v477 = vpack.c.b16 %v385, %v381
    %v478 = vpack.c.b16 %v386, %v382
    %v479 = vpack.c.b16 %v391, %v387
    %v480 = vpack.c.b16 %v392, %v388
    %v481 = vpack.c.b16 %v393, %v389
    %v482 = vpack.c.b16 %v394, %v390
    %v483 = vpack.c.b16 %v399, %v395
    %v484 = vpack.c.b16 %v400, %v396
    %v485 = vpack.c.b16 %v401, %v397
    %v486 = vpack.c.b16 %v402, %v398
    %v487 = vpack.c.b16 %v407, %v403
    %v488 = vpack.c.b16 %v408, %v404
    %v489 = vpack.c.b16 %v409, %v405
    %v490 = vpack.c.b16 %v410, %v406
    %v491 = vpack.c.b16 %v415, %v411
    %v492 = vpack.c.b16 %v416, %v412
    %v493 = vpack.c.b16 %v417, %v413
    %v494 = vpack.c.b16 %v418, %v414
    %v495 = vpack.c.b16 %v423, %v419
    %v496 = vpack.c.b16 %v424, %v420
    %v497 = vpack.c.b16 %v425, %v421
    %v498 = vpack.c.b16 %v426, %v422
    %v499 = vpack.c.b16 %v431, %v427
    %v500 = vpack.c.b16 %v432, %v428
    %v501 = vpack.c.b16 %v433, %v429
    %v502 = vpack.c.b16 %v434, %v430
    %v503 = vpack.c.b16 %v439, %v435
    %v504 = vpack.c.b16 %v440, %v436
    %v505 = vpack.c.b16 %v441, %v437
    %v506 = vpack.c.b16 %v442, %v438
    %571 = vmatprep.subr.bf16.mxu0 %v444
    %572 = vmatpush1.bf16.msra.mxu0 %v443
    %573 = vmatprep.subr.bf16.mxu0 %v448
    %574 = vmatpush1.bf16.msra.mxu0 %v447
    %575 = vmatprep.subr.bf16.mxu0 %v452
    %576 = vmatpush1.bf16.msra.mxu0 %v451
    %577 = vmatprep.subr.bf16.mxu0 %v456
    %578 = vmatpush1.bf16.msra.mxu0 %v455
    %579 = vmatprep.subr.bf16.mxu0 %v460
    %580 = vmatpush1.bf16.msra.mxu0 %v459
    %581 = vmatprep.subr.bf16.mxu0 %v464
    %582 = vmatpush1.bf16.msra.mxu0 %v463
    %583 = vmatprep.subr.bf16.mxu0 %v468
    %584 = vmatpush1.bf16.msra.mxu0 %v467
    %585 = vmatprep.subr.bf16.mxu0 %v472
    %586 = vmatpush1.bf16.msra.mxu0 %v471
    %587 = vmatprep.subr.bf16.mxu0 %v476
    %588 = vmatpush1.bf16.msra.mxu0 %v475
    %589 = vmatprep.subr.bf16.mxu0 %v480
    %590 = vmatpush1.bf16.msra.mxu0 %v479
    %591 = vmatprep.subr.bf16.mxu0 %v484
    %592 = vmatpush1.bf16.msra.mxu0 %v483
    %593 = vmatprep.subr.bf16.mxu0 %v488
    %594 = vmatpush1.bf16.msra.mxu0 %v487
    %595 = vmatprep.subr.bf16.mxu0 %v492
    %596 = vmatpush1.bf16.msra.mxu0 %v491
    %597 = vmatprep.subr.bf16.mxu0 %v496
    %598 = vmatpush1.bf16.msra.mxu0 %v495
    %599 = vmatprep.subr.bf16.mxu0 %v500
    %600 = vmatpush1.bf16.msra.mxu0 %v499
    %601 = vmatprep.subr.bf16.mxu0 %v504
    %602 = vmatpush1.bf16.msra.mxu0 %v503
    %603 = vmatprep.mubr.bf16.mxu0 %v220
    %604 = vmatmul.mubr.bf16.gmra.mrb[0].mxu0 %v219
    %v605 = vpop.f32.mrb[0].mxu0
    %v606 = vadd.f32 %v154, %v605
    %v607 = vpop.f32.mrb[0].mxu0
    %v608 = vadd.f32 %v158, %v607
    %v609 = vpop.f32.mrb[0].mxu0
    %v610 = vadd.f32 %v154, %v609
    %v611 = vpop.f32.mrb[0].mxu0
    %v612 = vadd.f32 %v158, %v611
    %613 = vmatprep.mubr.bf16.mxu0 %v222
    %614 = vmatmul.mubr.bf16.gmra.mrb[0].mxu0 %v221
    %v615 = vpop.f32.mrb[0].mxu0
    %v616 = vadd.f32 %v154, %v615
    %v617 = vpop.f32.mrb[0].mxu0
    %v618 = vadd.f32 %v158, %v617
    %v619 = vpop.f32.mrb[0].mxu0
    %v620 = vadd.f32 %v154, %v619
    %v621 = vpop.f32.mrb[0].mxu0
    %v622 = vadd.f32 %v158, %v621
    %623 = vmatprep.mubr.bf16.mxu0 %v224
    %624 = vmatmul.mubr.bf16.gmra.mrb[0].mxu0 %v223
    %v625 = vpop.f32.mrb[0].mxu0
    %v626 = vadd.f32 %v154, %v625
    %v627 = vpop.f32.mrb[0].mxu0
    %v628 = vadd.f32 %v158, %v627
    %v629 = vpop.f32.mrb[0].mxu0
    %v630 = vadd.f32 %v154, %v629
    %v631 = vpop.f32.mrb[0].mxu0
    %v632 = vadd.f32 %v158, %v631
    %633 = vmatprep.mubr.bf16.mxu0 %v226
    %634 = vmatmul.mubr.bf16.gmra.mrb[0].mxu0 %v225
    %v635 = vpop.f32.mrb[0].mxu0
    %v636 = vadd.f32 %v154, %v635
    %v637 = vpop.f32.mrb[0].mxu0
    %v638 = vadd.f32 %v158, %v637
    %v639 = vpop.f32.mrb[0].mxu0
    %v640 = vadd.f32 %v154, %v639
    %v641 = vpop.f32.mrb[0].mxu0
    %v642 = vadd.f32 %v158, %v641
    %643 = vmatprep.mubr.bf16.mxu0 %v228
    %644 = vmatmul.mubr.bf16.gmra.mrb[0].mxu0 %v227
    %v645 = vpop.f32.mrb[0].mxu0
    %v646 = vadd.f32 %v154, %v645
    %v647 = vpop.f32.mrb[0].mxu0
    %v648 = vadd.f32 %v158, %v647
    %v649 = vpop.f32.mrb[0].mxu0
    %v650 = vadd.f32 %v154, %v649
    %v651 = vpop.f32.mrb[0].mxu0
    %v652 = vadd.f32 %v158, %v651
    %653 = vmatprep.mubr.bf16.mxu0 %v230
    %654 = vmatmul.mubr.bf16.gmra.mrb[0].mxu0 %v229
    %v655 = vpop.f32.mrb[0].mxu0
    %v656 = vadd.f32 %v154, %v655
    %v657 = vpop.f32.mrb[0].mxu0
    %v658 = vadd.f32 %v158, %v657
    %v659 = vpop.f32.mrb[0].mxu0
    %v660 = vadd.f32 %v154, %v659
    %v661 = vpop.f32.mrb[0].mxu0
    %v662 = vadd.f32 %v158, %v661
    %663 = vmatprep.mubr.bf16.mxu0 %v232
    %664 = vmatmul.mubr.bf16.gmra.mrb[0].mxu0 %v231
    %v665 = vpop.f32.mrb[0].mxu0
    %v666 = vadd.f32 %v154, %v665
    %v667 = vpop.f32.mrb[0].mxu0
    %v668 = vadd.f32 %v158, %v667
    %v669 = vpop.f32.mrb[0].mxu0
    %v670 = vadd.f32 %v154, %v669
    %v671 = vpop.f32.mrb[0].mxu0
    %v672 = vadd.f32 %v158, %v671
    %673 = vmatprep.mubr.bf16.mxu0 %v234
    %674 = vmatmul.mubr.bf16.gmra.mrb[0].mxu0 %v233
    %v675 = vpop.f32.mrb[0].mxu0
    %v676 = vadd.f32 %v154, %v675
    %v677 = vpop.f32.mrb[0].mxu0
    %v678 = vadd.f32 %v158, %v677
    %v679 = vpop.f32.mrb[0].mxu0
    %v680 = vadd.f32 %v154, %v679
    %v681 = vpop.f32.mrb[0].mxu0
    %v682 = vadd.f32 %v158, %v681
    %683 = vdwg.mxu0
    %684 = vmatprep.subr.bf16.mxu0 %v446
    %685 = vmatpush1.bf16.msra.mxu0 %v445
    %686 = vmatprep.subr.bf16.mxu0 %v450
    %687 = vmatpush1.bf16.msra.mxu0 %v449
    %688 = vmatprep.subr.bf16.mxu0 %v454
    %689 = vmatpush1.bf16.msra.mxu0 %v453
    %690 = vmatprep.subr.bf16.mxu0 %v458
    %691 = vmatpush1.bf16.msra.mxu0 %v457
    %692 = vmatprep.subr.bf16.mxu0 %v462
    %693 = vmatpush1.bf16.msra.mxu0 %v461
    %694 = vmatprep.subr.bf16.mxu0 %v466
    %695 = vmatpush1.bf16.msra.mxu0 %v465
    %696 = vmatprep.subr.bf16.mxu0 %v470
    %697 = vmatpush1.bf16.msra.mxu0 %v469
    %698 = vmatprep.subr.bf16.mxu0 %v474
    %699 = vmatpush1.bf16.msra.mxu0 %v473
    %700 = vmatprep.subr.bf16.mxu0 %v478
    %701 = vmatpush1.bf16.msra.mxu0 %v477
    %702 = vmatprep.subr.bf16.mxu0 %v482
    %703 = vmatpush1.bf16.msra.mxu0 %v481
    %704 = vmatprep.subr.bf16.mxu0 %v486
    %705 = vmatpush1.bf16.msra.mxu0 %v485
    %706 = vmatprep.subr.bf16.mxu0 %v490
    %707 = vmatpush1.bf16.msra.mxu0 %v489
    %708 = vmatprep.subr.bf16.mxu0 %v494
    %709 = vmatpush1.bf16.msra.mxu0 %v493
    %710 = vmatprep.subr.bf16.mxu0 %v498
    %711 = vmatpush1.bf16.msra.mxu0 %v497
    %712 = vmatprep.subr.bf16.mxu0 %v502
    %713 = vmatpush1.bf16.msra.mxu0 %v501
    %714 = vmatprep.subr.bf16.mxu0 %v506
    %715 = vmatpush1.bf16.msra.mxu0 %v505
    %716 = vmatprep.mubr.bf16.mxu0 %v220
    %717 = vmatmul.mubr.bf16.gmra.mrb[0].mxu0 %v219
    %v718 = vpop.f32.mrb[0].mxu0
    %v719 = vadd.f32 %v162, %v718
    %v720 = vpop.f32.mrb[0].mxu0
    %v721 = vadd.f32 %v166, %v720
    %v722 = vpop.f32.mrb[0].mxu0
    %v723 = vadd.f32 %v162, %v722
    %v724 = vpop.f32.mrb[0].mxu0
    %v725 = vadd.f32 %v166, %v724
    %726 = vmatprep.mubr.bf16.mxu0 %v222
    %727 = vmatmul.mubr.bf16.gmra.mrb[0].mxu0 %v221
    %v728 = vpop.f32.mrb[0].mxu0
    %v729 = vadd.f32 %v162, %v728
    %v730 = vpop.f32.mrb[0].mxu0
    %v731 = vadd.f32 %v166, %v730
    %v732 = vpop.f32.mrb[0].mxu0
    %v733 = vadd.f32 %v162, %v732
    %v734 = vpop.f32.mrb[0].mxu0
    %v735 = vadd.f32 %v166, %v734
    %736 = vmatprep.mubr.bf16.mxu0 %v224
    %737 = vmatmul.mubr.bf16.gmra.mrb[0].mxu0 %v223
    %v738 = vpop.f32.mrb[0].mxu0
    %v739 = vadd.f32 %v162, %v738
    %v740 = vpop.f32.mrb[0].mxu0
    %v741 = vadd.f32 %v166, %v740
    %v742 = vpop.f32.mrb[0].mxu0
    %v743 = vadd.f32 %v162, %v742
    %v744 = vpop.f32.mrb[0].mxu0
    %v745 = vadd.f32 %v166, %v744
    %746 = vmatprep.mubr.bf16.mxu0 %v226
    %747 = vmatmul.mubr.bf16.gmra.mrb[0].mxu0 %v225
    %v748 = vpop.f32.mrb[0].mxu0
    %v749 = vadd.f32 %v162, %v748
    %v750 = vpop.f32.mrb[0].mxu0
    %v751 = vadd.f32 %v166, %v750
    %v752 = vpop.f32.mrb[0].mxu0
    %v753 = vadd.f32 %v162, %v752
    %v754 = vpop.f32.mrb[0].mxu0
    %v755 = vadd.f32 %v166, %v754
    %756 = vmatprep.mubr.bf16.mxu0 %v228
    %757 = vmatmul.mubr.bf16.gmra.mrb[0].mxu0 %v227
    %v758 = vpop.f32.mrb[0].mxu0
    %v759 = vadd.f32 %v162, %v758
    %v760 = vpop.f32.mrb[0].mxu0
    %v761 = vadd.f32 %v166, %v760
    %v762 = vpop.f32.mrb[0].mxu0
    %v763 = vadd.f32 %v162, %v762
    %v764 = vpop.f32.mrb[0].mxu0
    %v765 = vadd.f32 %v166, %v764
    %766 = vmatprep.mubr.bf16.mxu0 %v230
    %767 = vmatmul.mubr.bf16.gmra.mrb[0].mxu0 %v229
    %v768 = vpop.f32.mrb[0].mxu0
    %v769 = vadd.f32 %v162, %v768
    %v770 = vpop.f32.mrb[0].mxu0
    %v771 = vadd.f32 %v166, %v770
    %v772 = vpop.f32.mrb[0].mxu0
    %v773 = vadd.f32 %v162, %v772
    %v774 = vpop.f32.mrb[0].mxu0
    %v775 = vadd.f32 %v166, %v774
    %776 = vmatprep.mubr.bf16.mxu0 %v232
    %777 = vmatmul.mubr.bf16.gmra.mrb[0].mxu0 %v231
    %v778 = vpop.f32.mrb[0].mxu0
    %v779 = vadd.f32 %v162, %v778
    %v780 = vpop.f32.mrb[0].mxu0
    %v781 = vadd.f32 %v166, %v780
    %v782 = vpop.f32.mrb[0].mxu0
    %v783 = vadd.f32 %v162, %v782
    %v784 = vpop.f32.mrb[0].mxu0
    %v785 = vadd.f32 %v166, %v784
    %786 = vmatprep.mubr.bf16.mxu0 %v234
    %787 = vmatmul.mubr.bf16.gmra.mrb[0].mxu0 %v233
    %v788 = vpop.f32.mrb[0].mxu0
    %v789 = vadd.f32 %v162, %v788
    %v790 = vpop.f32.mrb[0].mxu0
    %v791 = vadd.f32 %v166, %v790
    %v792 = vpop.f32.mrb[0].mxu0
    %v793 = vadd.f32 %v162, %v792
    %v794 = vpop.f32.mrb[0].mxu0
    %v795 = vadd.f32 %v166, %v794
    %796 = vdwg.mxu0
    %v797 = vmul.f32 %v606, 0.2
    %v798 = vmul.f32 %v608, 0.2
    %v799 = vmul.f32 %v719, 0.2
    %v800 = vmul.f32 %v721, 0.2
    %v801 = vmul.f32 %v610, 0.2
    %v802 = vmul.f32 %v612, 0.2
    %v803 = vmul.f32 %v723, 0.2
    %v804 = vmul.f32 %v725, 0.2
    %v805 = vmul.f32 %v616, 0.2
    %v806 = vmul.f32 %v618, 0.2
    %v807 = vmul.f32 %v729, 0.2
    %v808 = vmul.f32 %v731, 0.2
    %v809 = vmul.f32 %v620, 0.2
    %v810 = vmul.f32 %v622, 0.2
    %v811 = vmul.f32 %v733, 0.2
    %v812 = vmul.f32 %v735, 0.2
    %v813 = vmul.f32 %v626, 0.2
    %v814 = vmul.f32 %v628, 0.2
    %v815 = vmul.f32 %v739, 0.2
    %v816 = vmul.f32 %v741, 0.2
    %v817 = vmul.f32 %v630, 0.2
    %v818 = vmul.f32 %v632, 0.2
    %v819 = vmul.f32 %v743, 0.2
    %v820 = vmul.f32 %v745, 0.2
    %v821 = vmul.f32 %v636, 0.2
    %v822 = vmul.f32 %v638, 0.2
    %v823 = vmul.f32 %v749, 0.2
    %v824 = vmul.f32 %v751, 0.2
    %v825 = vmul.f32 %v640, 0.2
    %v826 = vmul.f32 %v642, 0.2
    %v827 = vmul.f32 %v753, 0.2
    %v828 = vmul.f32 %v755, 0.2
    %v829 = vmul.f32 %v646, 0.2
    %v830 = vmul.f32 %v648, 0.2
    %v831 = vmul.f32 %v759, 0.2
    %v832 = vmul.f32 %v761, 0.2
    %v833 = vmul.f32 %v650, 0.2
    %v834 = vmul.f32 %v652, 0.2
    %v835 = vmul.f32 %v763, 0.2
    %v836 = vmul.f32 %v765, 0.2
    %v837 = vmul.f32 %v656, 0.2
    %v838 = vmul.f32 %v658, 0.2
    %v839 = vmul.f32 %v769, 0.2
    %v840 = vmul.f32 %v771, 0.2
    %v841 = vmul.f32 %v660, 0.2
    %v842 = vmul.f32 %v662, 0.2
    %v843 = vmul.f32 %v773, 0.2
    %v844 = vmul.f32 %v775, 0.2
    %v845 = vmul.f32 %v666, 0.2
    %v846 = vmul.f32 %v668, 0.2
    %v847 = vmul.f32 %v779, 0.2
    %v848 = vmul.f32 %v781, 0.2
    %v849 = vmul.f32 %v670, 0.2
    %v850 = vmul.f32 %v672, 0.2
    %v851 = vmul.f32 %v783, 0.2
    %v852 = vmul.f32 %v785, 0.2
    %v853 = vmul.f32 %v676, 0.2
    %v854 = vmul.f32 %v678, 0.2
    %v855 = vmul.f32 %v789, 0.2
    %v856 = vmul.f32 %v791, 0.2
    %v857 = vmul.f32 %v680, 0.2
    %v858 = vmul.f32 %v682, 0.2
    %v859 = vmul.f32 %v793, 0.2
    %v860 = vmul.f32 %v795, 0.2
    %v861 = vmax.f32 %v606, %v797
    %v862 = vmax.f32 %v608, %v798
    %v863 = vmax.f32 %v719, %v799
    %v864 = vmax.f32 %v721, %v800
    %v865 = vmax.f32 %v610, %v801
    %v866 = vmax.f32 %v612, %v802
    %v867 = vmax.f32 %v723, %v803
    %v868 = vmax.f32 %v725, %v804
    %v869 = vmax.f32 %v616, %v805
    %v870 = vmax.f32 %v618, %v806
    %v871 = vmax.f32 %v729, %v807
    %v872 = vmax.f32 %v731, %v808
    %v873 = vmax.f32 %v620, %v809
    %v874 = vmax.f32 %v622, %v810
    %v875 = vmax.f32 %v733, %v811
    %v876 = vmax.f32 %v735, %v812
    %v877 = vmax.f32 %v626, %v813
    %v878 = vmax.f32 %v628, %v814
    %v879 = vmax.f32 %v739, %v815
    %v880 = vmax.f32 %v741, %v816
    %v881 = vmax.f32 %v630, %v817
    %v882 = vmax.f32 %v632, %v818
    %v883 = vmax.f32 %v743, %v819
    %v884 = vmax.f32 %v745, %v820
    %v885 = vmax.f32 %v636, %v821
    %v886 = vmax.f32 %v638, %v822
    %v887 = vmax.f32 %v749, %v823
    %v888 = vmax.f32 %v751, %v824
    %v889 = vmax.f32 %v640, %v825
    %v890 = vmax.f32 %v642, %v826
    %v891 = vmax.f32 %v753, %v827
    %v892 = vmax.f32 %v755, %v828
    %v893 = vmax.f32 %v646, %v829
    %v894 = vmax.f32 %v648, %v830
    %v895 = vmax.f32 %v759, %v831
    %v896 = vmax.f32 %v761, %v832
    %v897 = vmax.f32 %v650, %v833
    %v898 = vmax.f32 %v652, %v834
    %v899 = vmax.f32 %v763, %v835
    %v900 = vmax.f32 %v765, %v836
    %v901 = vmax.f32 %v656, %v837
    %v902 = vmax.f32 %v658, %v838
    %v903 = vmax.f32 %v769, %v839
    %v904 = vmax.f32 %v771, %v840
    %v905 = vmax.f32 %v660, %v841
    %v906 = vmax.f32 %v662, %v842
    %v907 = vmax.f32 %v773, %v843
    %v908 = vmax.f32 %v775, %v844
    %v909 = vmax.f32 %v666, %v845
    %v910 = vmax.f32 %v668, %v846
    %v911 = vmax.f32 %v779, %v847
    %v912 = vmax.f32 %v781, %v848
    %v913 = vmax.f32 %v670, %v849
    %v914 = vmax.f32 %v672, %v850
    %v915 = vmax.f32 %v783, %v851
    %v916 = vmax.f32 %v785, %v852
    %v917 = vmax.f32 %v676, %v853
    %v918 = vmax.f32 %v678, %v854
    %v919 = vmax.f32 %v789, %v855
    %v920 = vmax.f32 %v791, %v856
    %v921 = vmax.f32 %v680, %v857
    %v922 = vmax.f32 %v682, %v858
    %v923 = vmax.f32 %v793, %v859
    %v924 = vmax.f32 %v795, %v860
    %v925 = vpack.c.bf16 %v865, %v861
    %v926 = vpack.c.bf16 %v866, %v862
    %v927 = vpack.c.bf16 %v867, %v863
    %v928 = vpack.c.bf16 %v868, %v864
    %v929 = vpack.c.bf16 %v873, %v869
    %v930 = vpack.c.bf16 %v874, %v870
    %v931 = vpack.c.bf16 %v875, %v871
    %v932 = vpack.c.bf16 %v876, %v872
    %v933 = vpack.c.bf16 %v881, %v877
    %v934 = vpack.c.bf16 %v882, %v878
    %v935 = vpack.c.bf16 %v883, %v879
    %v936 = vpack.c.bf16 %v884, %v880
    %v937 = vpack.c.bf16 %v889, %v885
    %v938 = vpack.c.bf16 %v890, %v886
    %v939 = vpack.c.bf16 %v891, %v887
    %v940 = vpack.c.bf16 %v892, %v888
    %v941 = vpack.c.bf16 %v897, %v893
    %v942 = vpack.c.bf16 %v898, %v894
    %v943 = vpack.c.bf16 %v899, %v895
    %v944 = vpack.c.bf16 %v900, %v896
    %v945 = vpack.c.bf16 %v905, %v901
    %v946 = vpack.c.bf16 %v906, %v902
    %v947 = vpack.c.bf16 %v907, %v903
    %v948 = vpack.c.bf16 %v908, %v904
    %v949 = vpack.c.bf16 %v913, %v909
    %v950 = vpack.c.bf16 %v914, %v910
    %v951 = vpack.c.bf16 %v915, %v911
    %v952 = vpack.c.bf16 %v916, %v912
    %v953 = vpack.c.bf16 %v921, %v917
    %v954 = vpack.c.bf16 %v922, %v918
    %v955 = vpack.c.bf16 %v923, %v919
    %v956 = vpack.c.bf16 %v924, %v920
    %v957 = vld [vmem:[#allocation7] sm:$0xff]
    %v958 = vld [vmem:[#allocation7 + $0x8] sm:$0xff]
    %v959 = vld [vmem:[#allocation7 + $0x10] sm:$0xff]
    %v960 = vld [vmem:[#allocation7 + $0x18] sm:$0xff]
    %v961 = vld [vmem:[#allocation7 + $0x20] sm:$0xff]
    %v962 = vld [vmem:[#allocation7 + $0x28] sm:$0xff]
    %v963 = vld [vmem:[#allocation7 + $0x30] sm:$0xff]
    %v964 = vld [vmem:[#allocation7 + $0x38] sm:$0xff]
    %v965 = vld [vmem:[#allocation7 + $0x40] sm:$0xff]
    %v966 = vld [vmem:[#allocation7 + $0x48] sm:$0xff]
    %v967 = vld [vmem:[#allocation7 + $0x50] sm:$0xff]
    %v968 = vld [vmem:[#allocation7 + $0x58] sm:$0xff]
    %v969 = vld [vmem:[#allocation7 + $0x60] sm:$0xff]
    %v970 = vld [vmem:[#allocation7 + $0x68] sm:$0xff]
    %v971 = vld [vmem:[#allocation7 + $0x70] sm:$0xff]
    %v972 = vld [vmem:[#allocation7 + $0x78] sm:$0xff]
    %v973 = vld [vmem:[#allocation7 + $0x80] sm:$0xff]
    %v974 = vld [vmem:[#allocation7 + $0x88] sm:$0xff]
    %v975 = vld [vmem:[#allocation7 + $0x90] sm:$0xff]
    %v976 = vld [vmem:[#allocation7 + $0x98] sm:$0xff]
    %v977 = vld [vmem:[#allocation7 + $0xa0] sm:$0xff]
    %v978 = vld [vmem:[#allocation7 + $0xa8] sm:$0xff]
    %v979 = vld [vmem:[#allocation7 + $0xb0] sm:$0xff]
    %v980 = vld [vmem:[#allocation7 + $0xb8] sm:$0xff]
    %v981 = vld [vmem:[#allocation7 + $0xc0] sm:$0xff]
    %v982 = vld [vmem:[#allocation7 + $0xc8] sm:$0xff]
    %v983 = vld [vmem:[#allocation7 + $0xd0] sm:$0xff]
    %v984 = vld [vmem:[#allocation7 + $0xd8] sm:$0xff]
    %v985 = vld [vmem:[#allocation7 + $0xe0] sm:$0xff]
    %v986 = vld [vmem:[#allocation7 + $0xe8] sm:$0xff]
    %v987 = vld [vmem:[#allocation7 + $0xf0] sm:$0xff]
    %v988 = vld [vmem:[#allocation7 + $0xf8] sm:$0xff]
    %v989 = vld [vmem:[#allocation7 + $0x100] sm:$0xff]
    %v990 = vld [vmem:[#allocation7 + $0x108] sm:$0xff]
    %v991 = vld [vmem:[#allocation7 + $0x110] sm:$0xff]
    %v992 = vld [vmem:[#allocation7 + $0x118] sm:$0xff]
    %v993 = vld [vmem:[#allocation7 + $0x120] sm:$0xff]
    %v994 = vld [vmem:[#allocation7 + $0x128] sm:$0xff]
    %v995 = vld [vmem:[#allocation7 + $0x130] sm:$0xff]
    %v996 = vld [vmem:[#allocation7 + $0x138] sm:$0xff]
    %v997 = vld [vmem:[#allocation7 + $0x140] sm:$0xff]
    %v998 = vld [vmem:[#allocation7 + $0x148] sm:$0xff]
    %v999 = vld [vmem:[#allocation7 + $0x150] sm:$0xff]
    %v1000 = vld [vmem:[#allocation7 + $0x158] sm:$0xff]
    %v1001 = vld [vmem:[#allocation7 + $0x160] sm:$0xff]
    %v1002 = vld [vmem:[#allocation7 + $0x168] sm:$0xff]
    %v1003 = vld [vmem:[#allocation7 + $0x170] sm:$0xff]
    %v1004 = vld [vmem:[#allocation7 + $0x178] sm:$0xff]
    %v1005 = vld [vmem:[#allocation7 + $0x180] sm:$0xff]
    %v1006 = vld [vmem:[#allocation7 + $0x188] sm:$0xff]
    %v1007 = vld [vmem:[#allocation7 + $0x190] sm:$0xff]
    %v1008 = vld [vmem:[#allocation7 + $0x198] sm:$0xff]
    %v1009 = vld [vmem:[#allocation7 + $0x1a0] sm:$0xff]
    %v1010 = vld [vmem:[#allocation7 + $0x1a8] sm:$0xff]
    %v1011 = vld [vmem:[#allocation7 + $0x1b0] sm:$0xff]
    %v1012 = vld [vmem:[#allocation7 + $0x1b8] sm:$0xff]
    %v1013 = vld [vmem:[#allocation7 + $0x1c0] sm:$0xff]
    %v1014 = vld [vmem:[#allocation7 + $0x1c8] sm:$0xff]
    %v1015 = vld [vmem:[#allocation7 + $0x1d0] sm:$0xff]
    %v1016 = vld [vmem:[#allocation7 + $0x1d8] sm:$0xff]
    %v1017 = vld [vmem:[#allocation7 + $0x1e0] sm:$0xff]
    %v1018 = vld [vmem:[#allocation7 + $0x1e8] sm:$0xff]
    %v1019 = vld [vmem:[#allocation7 + $0x1f0] sm:$0xff]
    %v1020 = vld [vmem:[#allocation7 + $0x1f8] sm:$0xff]
    %v1021 = vld [vmem:[%s4] sm:$0x3]
    %v1023 = vlaneseq
    %v1024 = vshrl.u32 %v1023, 7
    %v1025 = vsub.s32 0, %v1024
    %v1026 = vrot.slane %v1021, %v1025
    %v1027 = vlaneseq
    %v1028 = vshrl.u32 %v1027, 7
    %v1029 = vsub.s32 1, %v1028
    %v1030 = vrot.slane %v1021, %v1029
    %v1097 = vunpack.c.l.b16 %v957
    %v1098 = vunpack.c.h.b16 %v957
    %v1099 = vunpack.c.l.b16 %v958
    %v1100 = vunpack.c.h.b16 %v958
    %v1101 = vunpack.c.l.b16 %v959
    %v1102 = vunpack.c.h.b16 %v959
    %v1103 = vunpack.c.l.b16 %v960
    %v1104 = vunpack.c.h.b16 %v960
    %v1105 = vunpack.c.l.b16 %v961
    %v1106 = vunpack.c.h.b16 %v961
    %v1107 = vunpack.c.l.b16 %v962
    %v1108 = vunpack.c.h.b16 %v962
    %v1109 = vunpack.c.l.b16 %v963
    %v1110 = vunpack.c.h.b16 %v963
    %v1111 = vunpack.c.l.b16 %v964
    %v1112 = vunpack.c.h.b16 %v964
    %v1113 = vunpack.c.l.b16 %v965
    %v1114 = vunpack.c.h.b16 %v965
    %v1115 = vunpack.c.l.b16 %v966
    %v1116 = vunpack.c.h.b16 %v966
    %v1117 = vunpack.c.l.b16 %v967
    %v1118 = vunpack.c.h.b16 %v967
    %v1119 = vunpack.c.l.b16 %v968
    %v1120 = vunpack.c.h.b16 %v968
    %v1121 = vunpack.c.l.b16 %v969
    %v1122 = vunpack.c.h.b16 %v969
    %v1123 = vunpack.c.l.b16 %v970
    %v1124 = vunpack.c.h.b16 %v970
    %v1125 = vunpack.c.l.b16 %v971
    %v1126 = vunpack.c.h.b16 %v971
    %v1127 = vunpack.c.l.b16 %v972
    %v1128 = vunpack.c.h.b16 %v972
    %v1129 = vunpack.c.l.b16 %v973
    %v1130 = vunpack.c.h.b16 %v973
    %v1131 = vunpack.c.l.b16 %v974
    %v1132 = vunpack.c.h.b16 %v974
    %v1133 = vunpack.c.l.b16 %v975
    %v1134 = vunpack.c.h.b16 %v975
    %v1135 = vunpack.c.l.b16 %v976
    %v1136 = vunpack.c.h.b16 %v976
    %v1137 = vunpack.c.l.b16 %v977
    %v1138 = vunpack.c.h.b16 %v977
    %v1139 = vunpack.c.l.b16 %v978
    %v1140 = vunpack.c.h.b16 %v978
    %v1141 = vunpack.c.l.b16 %v979
    %v1142 = vunpack.c.h.b16 %v979
    %v1143 = vunpack.c.l.b16 %v980
    %v1144 = vunpack.c.h.b16 %v980
    %v1145 = vunpack.c.l.b16 %v981
    %v1146 = vunpack.c.h.b16 %v981
    %v1147 = vunpack.c.l.b16 %v982
    %v1148 = vunpack.c.h.b16 %v982
    %v1149 = vunpack.c.l.b16 %v983
    %v1150 = vunpack.c.h.b16 %v983
    %v1151 = vunpack.c.l.b16 %v984
    %v1152 = vunpack.c.h.b16 %v984
    %v1153 = vunpack.c.l.b16 %v985
    %v1154 = vunpack.c.h.b16 %v985
    %v1155 = vunpack.c.l.b16 %v986
    %v1156 = vunpack.c.h.b16 %v986
    %v1157 = vunpack.c.l.b16 %v987
    %v1158 = vunpack.c.h.b16 %v987
    %v1159 = vunpack.c.l.b16 %v988
    %v1160 = vunpack.c.h.b16 %v988
    %v1161 = vunpack.c.l.b16 %v989
    %v1162 = vunpack.c.h.b16 %v989
    %v1163 = vunpack.c.l.b16 %v990
    %v1164 = vunpack.c.h.b16 %v990
    %v1165 = vunpack.c.l.b16 %v991
    %v1166 = vunpack.c.h.b16 %v991
    %v1167 = vunpack.c.l.b16 %v992
    %v1168 = vunpack.c.h.b16 %v992
    %v1169 = vunpack.c.l.b16 %v993
    %v1170 = vunpack.c.h.b16 %v993
    %v1171 = vunpack.c.l.b16 %v994
    %v1172 = vunpack.c.h.b16 %v994
    %v1173 = vunpack.c.l.b16 %v995
    %v1174 = vunpack.c.h.b16 %v995
    %v1175 = vunpack.c.l.b16 %v996
    %v1176 = vunpack.c.h.b16 %v996
    %v1177 = vunpack.c.l.b16 %v997
    %v1178 = vunpack.c.h.b16 %v997
    %v1179 = vunpack.c.l.b16 %v998
    %v1180 = vunpack.c.h.b16 %v998
    %v1181 = vunpack.c.l.b16 %v999
    %v1182 = vunpack.c.h.b16 %v999
    %v1183 = vunpack.c.l.b16 %v1000
    %v1184 = vunpack.c.h.b16 %v1000
    %v1185 = vunpack.c.l.b16 %v1001
    %v1186 = vunpack.c.h.b16 %v1001
    %v1187 = vunpack.c.l.b16 %v1002
    %v1188 = vunpack.c.h.b16 %v1002
    %v1189 = vunpack.c.l.b16 %v1003
    %v1190 = vunpack.c.h.b16 %v1003
    %v1191 = vunpack.c.l.b16 %v1004
    %v1192 = vunpack.c.h.b16 %v1004
    %v1193 = vunpack.c.l.b16 %v1005
    %v1194 = vunpack.c.h.b16 %v1005
    %v1195 = vunpack.c.l.b16 %v1006
    %v1196 = vunpack.c.h.b16 %v1006
    %v1197 = vunpack.c.l.b16 %v1007
    %v1198 = vunpack.c.h.b16 %v1007
    %v1199 = vunpack.c.l.b16 %v1008
    %v1200 = vunpack.c.h.b16 %v1008
    %v1201 = vunpack.c.l.b16 %v1009
    %v1202 = vunpack.c.h.b16 %v1009
    %v1203 = vunpack.c.l.b16 %v1010
    %v1204 = vunpack.c.h.b16 %v1010
    %v1205 = vunpack.c.l.b16 %v1011
    %v1206 = vunpack.c.h.b16 %v1011
    %v1207 = vunpack.c.l.b16 %v1012
    %v1208 = vunpack.c.h.b16 %v1012
    %v1209 = vunpack.c.l.b16 %v1013
    %v1210 = vunpack.c.h.b16 %v1013
    %v1211 = vunpack.c.l.b16 %v1014
    %v1212 = vunpack.c.h.b16 %v1014
    %v1213 = vunpack.c.l.b16 %v1015
    %v1214 = vunpack.c.h.b16 %v1015
    %v1215 = vunpack.c.l.b16 %v1016
    %v1216 = vunpack.c.h.b16 %v1016
    %v1217 = vunpack.c.l.b16 %v1017
    %v1218 = vunpack.c.h.b16 %v1017
    %v1219 = vunpack.c.l.b16 %v1018
    %v1220 = vunpack.c.h.b16 %v1018
    %v1221 = vunpack.c.l.b16 %v1019
    %v1222 = vunpack.c.h.b16 %v1019
    %v1223 = vunpack.c.l.b16 %v1020
    %v1224 = vunpack.c.h.b16 %v1020
    %v1225 = vpack.c.b16 %v1099, %v1097
    %v1226 = vpack.c.b16 %v1100, %v1098
    %v1227 = vpack.c.b16 %v1103, %v1101
    %v1228 = vpack.c.b16 %v1104, %v1102
    %v1229 = vpack.c.b16 %v1107, %v1105
    %v1230 = vpack.c.b16 %v1108, %v1106
    %v1231 = vpack.c.b16 %v1111, %v1109
    %v1232 = vpack.c.b16 %v1112, %v1110
    %v1233 = vpack.c.b16 %v1115, %v1113
    %v1234 = vpack.c.b16 %v1116, %v1114
    %v1235 = vpack.c.b16 %v1119, %v1117
    %v1236 = vpack.c.b16 %v1120, %v1118
    %v1237 = vpack.c.b16 %v1123, %v1121
    %v1238 = vpack.c.b16 %v1124, %v1122
    %v1239 = vpack.c.b16 %v1127, %v1125
    %v1240 = vpack.c.b16 %v1128, %v1126
    %v1241 = vpack.c.b16 %v1131, %v1129
    %v1242 = vpack.c.b16 %v1132, %v1130
    %v1243 = vpack.c.b16 %v1135, %v1133
    %v1244 = vpack.c.b16 %v1136, %v1134
    %v1245 = vpack.c.b16 %v1139, %v1137
    %v1246 = vpack.c.b16 %v1140, %v1138
    %v1247 = vpack.c.b16 %v1143, %v1141
    %v1248 = vpack.c.b16 %v1144, %v1142
    %v1249 = vpack.c.b16 %v1147, %v1145
    %v1250 = vpack.c.b16 %v1148, %v1146
    %v1251 = vpack.c.b16 %v1151, %v1149
    %v1252 = vpack.c.b16 %v1152, %v1150
    %v1253 = vpack.c.b16 %v1155, %v1153
    %v1254 = vpack.c.b16 %v1156, %v1154
    %v1255 = vpack.c.b16 %v1159, %v1157
    %v1256 = vpack.c.b16 %v1160, %v1158
    %v1257 = vpack.c.b16 %v1163, %v1161
    %v1258 = vpack.c.b16 %v1164, %v1162
    %v1259 = vpack.c.b16 %v1167, %v1165
    %v1260 = vpack.c.b16 %v1168, %v1166
    %v1261 = vpack.c.b16 %v1171, %v1169
    %v1262 = vpack.c.b16 %v1172, %v1170
    %v1263 = vpack.c.b16 %v1175, %v1173
    %v1264 = vpack.c.b16 %v1176, %v1174
    %v1265 = vpack.c.b16 %v1179, %v1177
    %v1266 = vpack.c.b16 %v1180, %v1178
    %v1267 = vpack.c.b16 %v1183, %v1181
    %v1268 = vpack.c.b16 %v1184, %v1182
    %v1269 = vpack.c.b16 %v1187, %v1185
    %v1270 = vpack.c.b16 %v1188, %v1186
    %v1271 = vpack.c.b16 %v1191, %v1189
    %v1272 = vpack.c.b16 %v1192, %v1190
    %v1273 = vpack.c.b16 %v1195, %v1193
    %v1274 = vpack.c.b16 %v1196, %v1194
    %v1275 = vpack.c.b16 %v1199, %v1197
    %v1276 = vpack.c.b16 %v1200, %v1198
    %v1277 = vpack.c.b16 %v1203, %v1201
    %v1278 = vpack.c.b16 %v1204, %v1202
    %v1279 = vpack.c.b16 %v1207, %v1205
    %v1280 = vpack.c.b16 %v1208, %v1206
    %v1281 = vpack.c.b16 %v1211, %v1209
    %v1282 = vpack.c.b16 %v1212, %v1210
    %v1283 = vpack.c.b16 %v1215, %v1213
    %v1284 = vpack.c.b16 %v1216, %v1214
    %v1285 = vpack.c.b16 %v1219, %v1217
    %v1286 = vpack.c.b16 %v1220, %v1218
    %v1287 = vpack.c.b16 %v1223, %v1221
    %v1288 = vpack.c.b16 %v1224, %v1222
    %1353 = vmatprep.subr.bf16.mxu0 %v1226
    %1354 = vmatpush1.bf16.msra.mxu0 %v1225
    %1355 = vmatprep.subr.bf16.mxu0 %v1228
    %1356 = vmatpush1.bf16.msra.mxu0 %v1227
    %1357 = vmatprep.subr.bf16.mxu0 %v1230
    %1358 = vmatpush1.bf16.msra.mxu0 %v1229
    %1359 = vmatprep.subr.bf16.mxu0 %v1232
    %1360 = vmatpush1.bf16.msra.mxu0 %v1231
    %1361 = vmatprep.subr.bf16.mxu0 %v1234
    %1362 = vmatpush1.bf16.msra.mxu0 %v1233
    %1363 = vmatprep.subr.bf16.mxu0 %v1236
    %1364 = vmatpush1.bf16.msra.mxu0 %v1235
    %1365 = vmatprep.subr.bf16.mxu0 %v1238
    %1366 = vmatpush1.bf16.msra.mxu0 %v1237
    %1367 = vmatprep.subr.bf16.mxu0 %v1240
    %1368 = vmatpush1.bf16.msra.mxu0 %v1239
    %1369 = vmatprep.subr.bf16.mxu0 %v1242
    %1370 = vmatpush1.bf16.msra.mxu0 %v1241
    %1371 = vmatprep.subr.bf16.mxu0 %v1244
    %1372 = vmatpush1.bf16.msra.mxu0 %v1243
    %1373 = vmatprep.subr.bf16.mxu0 %v1246
    %1374 = vmatpush1.bf16.msra.mxu0 %v1245
    %1375 = vmatprep.subr.bf16.mxu0 %v1248
    %1376 = vmatpush1.bf16.msra.mxu0 %v1247
    %1377 = vmatprep.subr.bf16.mxu0 %v1250
    %1378 = vmatpush1.bf16.msra.mxu0 %v1249
    %1379 = vmatprep.subr.bf16.mxu0 %v1252
    %1380 = vmatpush1.bf16.msra.mxu0 %v1251
    %1381 = vmatprep.subr.bf16.mxu0 %v1254
    %1382 = vmatpush1.bf16.msra.mxu0 %v1253
    %1383 = vmatprep.subr.bf16.mxu0 %v1256
    %1384 = vmatpush1.bf16.msra.mxu0 %v1255
    %1385 = vmatprep.mubr.bf16.mxu0 %v926
    %1386 = vmatmul.mubr.bf16.gmra.mrb[0].mxu0 %v925
    %v1387 = vpop.f32.mrb[0].mxu0
    %v1388 = vadd.f32 %v1026, %v1387
    %v1389 = vpop.f32.mrb[0].mxu0
    %v1390 = vadd.f32 %v1030, %v1389
    %v1391 = vpop.f32.mrb[0].mxu0
    %v1392 = vadd.f32 %v1026, %v1391
    %v1393 = vpop.f32.mrb[0].mxu0
    %v1394 = vadd.f32 %v1030, %v1393
    %1395 = vmatprep.mubr.bf16.mxu0 %v930
    %1396 = vmatmul.mubr.bf16.gmra.mrb[0].mxu0 %v929
    %v1397 = vpop.f32.mrb[0].mxu0
    %v1398 = vadd.f32 %v1026, %v1397
    %v1399 = vpop.f32.mrb[0].mxu0
    %v1400 = vadd.f32 %v1030, %v1399
    %v1401 = vpop.f32.mrb[0].mxu0
    %v1402 = vadd.f32 %v1026, %v1401
    %v1403 = vpop.f32.mrb[0].mxu0
    %v1404 = vadd.f32 %v1030, %v1403
    %1405 = vmatprep.mubr.bf16.mxu0 %v934
    %1406 = vmatmul.mubr.bf16.gmra.mrb[0].mxu0 %v933
    %v1407 = vpop.f32.mrb[0].mxu0
    %v1408 = vadd.f32 %v1026, %v1407
    %v1409 = vpop.f32.mrb[0].mxu0
    %v1410 = vadd.f32 %v1030, %v1409
    %v1411 = vpop.f32.mrb[0].mxu0
    %v1412 = vadd.f32 %v1026, %v1411
    %v1413 = vpop.f32.mrb[0].mxu0
    %v1414 = vadd.f32 %v1030, %v1413
    %1415 = vmatprep.mubr.bf16.mxu0 %v938
    %1416 = vmatmul.mubr.bf16.gmra.mrb[0].mxu0 %v937
    %v1417 = vpop.f32.mrb[0].mxu0
    %v1418 = vadd.f32 %v1026, %v1417
    %v1419 = vpop.f32.mrb[0].mxu0
    %v1420 = vadd.f32 %v1030, %v1419
    %v1421 = vpop.f32.mrb[0].mxu0
    %v1422 = vadd.f32 %v1026, %v1421
    %v1423 = vpop.f32.mrb[0].mxu0
    %v1424 = vadd.f32 %v1030, %v1423
    %1425 = vmatprep.mubr.bf16.mxu0 %v942
    %1426 = vmatmul.mubr.bf16.gmra.mrb[0].mxu0 %v941
    %v1427 = vpop.f32.mrb[0].mxu0
    %v1428 = vadd.f32 %v1026, %v1427
    %v1429 = vpop.f32.mrb[0].mxu0
    %v1430 = vadd.f32 %v1030, %v1429
    %v1431 = vpop.f32.mrb[0].mxu0
    %v1432 = vadd.f32 %v1026, %v1431
    %v1433 = vpop.f32.mrb[0].mxu0
    %v1434 = vadd.f32 %v1030, %v1433
    %1435 = vmatprep.mubr.bf16.mxu0 %v946
    %1436 = vmatmul.mubr.bf16.gmra.mrb[0].mxu0 %v945
    %v1437 = vpop.f32.mrb[0].mxu0
    %v1438 = vadd.f32 %v1026, %v1437
    %v1439 = vpop.f32.mrb[0].mxu0
    %v1440 = vadd.f32 %v1030, %v1439
    %v1441 = vpop.f32.mrb[0].mxu0
    %v1442 = vadd.f32 %v1026, %v1441
    %v1443 = vpop.f32.mrb[0].mxu0
    %v1444 = vadd.f32 %v1030, %v1443
    %1445 = vmatprep.mubr.bf16.mxu0 %v950
    %1446 = vmatmul.mubr.bf16.gmra.mrb[0].mxu0 %v949
    %v1447 = vpop.f32.mrb[0].mxu0
    %v1448 = vadd.f32 %v1026, %v1447
    %v1449 = vpop.f32.mrb[0].mxu0
    %v1450 = vadd.f32 %v1030, %v1449
    %v1451 = vpop.f32.mrb[0].mxu0
    %v1452 = vadd.f32 %v1026, %v1451
    %v1453 = vpop.f32.mrb[0].mxu0
    %v1454 = vadd.f32 %v1030, %v1453
    %1455 = vmatprep.mubr.bf16.mxu0 %v954
    %1456 = vmatmul.mubr.bf16.gmra.mrb[0].mxu0 %v953
    %v1457 = vpop.f32.mrb[0].mxu0
    %v1458 = vadd.f32 %v1026, %v1457
    %v1459 = vpop.f32.mrb[0].mxu0
    %v1460 = vadd.f32 %v1030, %v1459
    %v1461 = vpop.f32.mrb[0].mxu0
    %v1462 = vadd.f32 %v1026, %v1461
    %v1463 = vpop.f32.mrb[0].mxu0
    %v1464 = vadd.f32 %v1030, %v1463
    %1465 = vdwg.mxu0
    %1466 = vmatprep.subr.bf16.mxu0 %v1258
    %1467 = vmatpush1.bf16.msra.mxu0 %v1257
    %1468 = vmatprep.subr.bf16.mxu0 %v1260
    %1469 = vmatpush1.bf16.msra.mxu0 %v1259
    %1470 = vmatprep.subr.bf16.mxu0 %v1262
    %1471 = vmatpush1.bf16.msra.mxu0 %v1261
    %1472 = vmatprep.subr.bf16.mxu0 %v1264
    %1473 = vmatpush1.bf16.msra.mxu0 %v1263
    %1474 = vmatprep.subr.bf16.mxu0 %v1266
    %1475 = vmatpush1.bf16.msra.mxu0 %v1265
    %1476 = vmatprep.subr.bf16.mxu0 %v1268
    %1477 = vmatpush1.bf16.msra.mxu0 %v1267
    %1478 = vmatprep.subr.bf16.mxu0 %v1270
    %1479 = vmatpush1.bf16.msra.mxu0 %v1269
    %1480 = vmatprep.subr.bf16.mxu0 %v1272
    %1481 = vmatpush1.bf16.msra.mxu0 %v1271
    %1482 = vmatprep.subr.bf16.mxu0 %v1274
    %1483 = vmatpush1.bf16.msra.mxu0 %v1273
    %1484 = vmatprep.subr.bf16.mxu0 %v1276
    %1485 = vmatpush1.bf16.msra.mxu0 %v1275
    %1486 = vmatprep.subr.bf16.mxu0 %v1278
    %1487 = vmatpush1.bf16.msra.mxu0 %v1277
    %1488 = vmatprep.subr.bf16.mxu0 %v1280
    %1489 = vmatpush1.bf16.msra.mxu0 %v1279
    %1490 = vmatprep.subr.bf16.mxu0 %v1282
    %1491 = vmatpush1.bf16.msra.mxu0 %v1281
    %1492 = vmatprep.subr.bf16.mxu0 %v1284
    %1493 = vmatpush1.bf16.msra.mxu0 %v1283
    %1494 = vmatprep.subr.bf16.mxu0 %v1286
    %1495 = vmatpush1.bf16.msra.mxu0 %v1285
    %1496 = vmatprep.subr.bf16.mxu0 %v1288
    %1497 = vmatpush1.bf16.msra.mxu0 %v1287
    %1498 = vmatprep.mubr.bf16.mxu0 %v928
    %1499 = vmatmul.mubr.bf16.gmra.mrb[0].mxu0 %v927
    %v1500 = vpop.f32.mrb[0].mxu0
    %v1501 = vadd.f32 %v1388, %v1500
    %v1502 = vpop.f32.mrb[0].mxu0
    %v1503 = vadd.f32 %v1390, %v1502
    %v1504 = vpop.f32.mrb[0].mxu0
    %v1505 = vadd.f32 %v1392, %v1504
    %v1506 = vpop.f32.mrb[0].mxu0
    %v1507 = vadd.f32 %v1394, %v1506
    %1508 = vmatprep.mubr.bf16.mxu0 %v932
    %1509 = vmatmul.mubr.bf16.gmra.mrb[0].mxu0 %v931
    %v1510 = vpop.f32.mrb[0].mxu0
    %v1511 = vadd.f32 %v1398, %v1510
    %v1512 = vpop.f32.mrb[0].mxu0
    %v1513 = vadd.f32 %v1400, %v1512
    %v1514 = vpop.f32.mrb[0].mxu0
    %v1515 = vadd.f32 %v1402, %v1514
    %v1516 = vpop.f32.mrb[0].mxu0
    %v1517 = vadd.f32 %v1404, %v1516
    %1518 = vmatprep.mubr.bf16.mxu0 %v936
    %1519 = vmatmul.mubr.bf16.gmra.mrb[0].mxu0 %v935
    %v1520 = vpop.f32.mrb[0].mxu0
    %v1521 = vadd.f32 %v1408, %v1520
    %v1522 = vpop.f32.mrb[0].mxu0
    %v1523 = vadd.f32 %v1410, %v1522
    %v1524 = vpop.f32.mrb[0].mxu0
    %v1525 = vadd.f32 %v1412, %v1524
    %v1526 = vpop.f32.mrb[0].mxu0
    %v1527 = vadd.f32 %v1414, %v1526
    %1528 = vmatprep.mubr.bf16.mxu0 %v940
    %1529 = vmatmul.mubr.bf16.gmra.mrb[0].mxu0 %v939
    %v1530 = vpop.f32.mrb[0].mxu0
    %v1531 = vadd.f32 %v1418, %v1530
    %v1532 = vpop.f32.mrb[0].mxu0
    %v1533 = vadd.f32 %v1420, %v1532
    %v1534 = vpop.f32.mrb[0].mxu0
    %v1535 = vadd.f32 %v1422, %v1534
    %v1536 = vpop.f32.mrb[0].mxu0
    %v1537 = vadd.f32 %v1424, %v1536
    %1538 = vmatprep.mubr.bf16.mxu0 %v944
    %1539 = vmatmul.mubr.bf16.gmra.mrb[0].mxu0 %v943
    %v1540 = vpop.f32.mrb[0].mxu0
    %v1541 = vadd.f32 %v1428, %v1540
    %v1542 = vpop.f32.mrb[0].mxu0
    %v1543 = vadd.f32 %v1430, %v1542
    %v1544 = vpop.f32.mrb[0].mxu0
    %v1545 = vadd.f32 %v1432, %v1544
    %v1546 = vpop.f32.mrb[0].mxu0
    %v1547 = vadd.f32 %v1434, %v1546
    %1548 = vmatprep.mubr.bf16.mxu0 %v948
    %1549 = vmatmul.mubr.bf16.gmra.mrb[0].mxu0 %v947
    %v1550 = vpop.f32.mrb[0].mxu0
    %v1551 = vadd.f32 %v1438, %v1550
    %v1552 = vpop.f32.mrb[0].mxu0
    %v1553 = vadd.f32 %v1440, %v1552
    %v1554 = vpop.f32.mrb[0].mxu0
    %v1555 = vadd.f32 %v1442, %v1554
    %v1556 = vpop.f32.mrb[0].mxu0
    %v1557 = vadd.f32 %v1444, %v1556
    %1558 = vmatprep.mubr.bf16.mxu0 %v952
    %1559 = vmatmul.mubr.bf16.gmra.mrb[0].mxu0 %v951
    %v1560 = vpop.f32.mrb[0].mxu0
    %v1561 = vadd.f32 %v1448, %v1560
    %v1562 = vpop.f32.mrb[0].mxu0
    %v1563 = vadd.f32 %v1450, %v1562
    %v1564 = vpop.f32.mrb[0].mxu0
    %v1565 = vadd.f32 %v1452, %v1564
    %v1566 = vpop.f32.mrb[0].mxu0
    %v1567 = vadd.f32 %v1454, %v1566
    %1568 = vmatprep.mubr.bf16.mxu0 %v956
    %1569 = vmatmul.mubr.bf16.gmra.mrb[0].mxu0 %v955
    %v1570 = vpop.f32.mrb[0].mxu0
    %v1571 = vadd.f32 %v1458, %v1570
    %v1572 = vpop.f32.mrb[0].mxu0
    %v1573 = vadd.f32 %v1460, %v1572
    %v1574 = vpop.f32.mrb[0].mxu0
    %v1575 = vadd.f32 %v1462, %v1574
    %v1576 = vpop.f32.mrb[0].mxu0
    %v1577 = vadd.f32 %v1464, %v1576
    %1578 = vdwg.mxu0
    %v1579 = vmul.f32 %v1501, 0.2
    %v1580 = vmul.f32 %v1503, 0.2
    %v1581 = vmul.f32 %v1505, 0.2
    %v1582 = vmul.f32 %v1507, 0.2
    %v1583 = vmul.f32 %v1511, 0.2
    %v1584 = vmul.f32 %v1513, 0.2
    %v1585 = vmul.f32 %v1515, 0.2
    %v1586 = vmul.f32 %v1517, 0.2
    %v1587 = vmul.f32 %v1521, 0.2
    %v1588 = vmul.f32 %v1523, 0.2
    %v1589 = vmul.f32 %v1525, 0.2
    %v1590 = vmul.f32 %v1527, 0.2
    %v1591 = vmul.f32 %v1531, 0.2
    %v1592 = vmul.f32 %v1533, 0.2
    %v1593 = vmul.f32 %v1535, 0.2
    %v1594 = vmul.f32 %v1537, 0.2
    %v1595 = vmul.f32 %v1541, 0.2
    %v1596 = vmul.f32 %v1543, 0.2
    %v1597 = vmul.f32 %v1545, 0.2
    %v1598 = vmul.f32 %v1547, 0.2
    %v1599 = vmul.f32 %v1551, 0.2
    %v1600 = vmul.f32 %v1553, 0.2
    %v1601 = vmul.f32 %v1555, 0.2
    %v1602 = vmul.f32 %v1557, 0.2
    %v1603 = vmul.f32 %v1561, 0.2
    %v1604 = vmul.f32 %v1563, 0.2
    %v1605 = vmul.f32 %v1565, 0.2
    %v1606 = vmul.f32 %v1567, 0.2
    %v1607 = vmul.f32 %v1571, 0.2
    %v1608 = vmul.f32 %v1573, 0.2
    %v1609 = vmul.f32 %v1575, 0.2
    %v1610 = vmul.f32 %v1577, 0.2
    %v1611 = vmax.f32 %v1501, %v1579
    %v1612 = vmax.f32 %v1503, %v1580
    %v1613 = vmax.f32 %v1505, %v1581
    %v1614 = vmax.f32 %v1507, %v1582
    %v1615 = vmax.f32 %v1511, %v1583
    %v1616 = vmax.f32 %v1513, %v1584
    %v1617 = vmax.f32 %v1515, %v1585
    %v1618 = vmax.f32 %v1517, %v1586
    %v1619 = vmax.f32 %v1521, %v1587
    %v1620 = vmax.f32 %v1523, %v1588
    %v1621 = vmax.f32 %v1525, %v1589
    %v1622 = vmax.f32 %v1527, %v1590
    %v1623 = vmax.f32 %v1531, %v1591
    %v1624 = vmax.f32 %v1533, %v1592
    %v1625 = vmax.f32 %v1535, %v1593
    %v1626 = vmax.f32 %v1537, %v1594
    %v1627 = vmax.f32 %v1541, %v1595
    %v1628 = vmax.f32 %v1543, %v1596
    %v1629 = vmax.f32 %v1545, %v1597
    %v1630 = vmax.f32 %v1547, %v1598
    %v1631 = vmax.f32 %v1551, %v1599
    %v1632 = vmax.f32 %v1553, %v1600
    %v1633 = vmax.f32 %v1555, %v1601
    %v1634 = vmax.f32 %v1557, %v1602
    %v1635 = vmax.f32 %v1561, %v1603
    %v1636 = vmax.f32 %v1563, %v1604
    %v1637 = vmax.f32 %v1565, %v1605
    %v1638 = vmax.f32 %v1567, %v1606
    %v1639 = vmax.f32 %v1571, %v1607
    %v1640 = vmax.f32 %v1573, %v1608
    %v1641 = vmax.f32 %v1575, %v1609
    %v1642 = vmax.f32 %v1577, %v1610
    %v1643 = vld [vmem:[%s5] sm:$0x3]
    %v1645 = vlaneseq
    %v1646 = vshrl.u32 %v1645, 7
    %v1647 = vsub.s32 0, %v1646
    %v1648 = vrot.slane %v1643, %v1647
    %v1649 = vlaneseq
    %v1650 = vshrl.u32 %v1649, 7
    %v1651 = vsub.s32 1, %v1650
    %v1652 = vrot.slane %v1643, %v1651
    %v1655 = vmul.f32 %v1611, %v1648
    %v1656 = vmul.f32 %v1612, %v1652
    %v1657 = vmul.f32 %v1613, %v1648
    %v1658 = vmul.f32 %v1614, %v1652
    %v1659 = vmul.f32 %v1615, %v1648
    %v1660 = vmul.f32 %v1616, %v1652
    %v1661 = vmul.f32 %v1617, %v1648
    %v1662 = vmul.f32 %v1618, %v1652
    %v1663 = vmul.f32 %v1619, %v1648
    %v1664 = vmul.f32 %v1620, %v1652
    %v1665 = vmul.f32 %v1621, %v1648
    %v1666 = vmul.f32 %v1622, %v1652
    %v1667 = vmul.f32 %v1623, %v1648
    %v1668 = vmul.f32 %v1624, %v1652
    %v1669 = vmul.f32 %v1625, %v1648
    %v1670 = vmul.f32 %v1626, %v1652
    %v1671 = vmul.f32 %v1627, %v1648
    %v1672 = vmul.f32 %v1628, %v1652
    %v1673 = vmul.f32 %v1629, %v1648
    %v1674 = vmul.f32 %v1630, %v1652
    %v1675 = vmul.f32 %v1631, %v1648
    %v1676 = vmul.f32 %v1632, %v1652
    %v1677 = vmul.f32 %v1633, %v1648
    %v1678 = vmul.f32 %v1634, %v1652
    %v1679 = vmul.f32 %v1635, %v1648
    %v1680 = vmul.f32 %v1636, %v1652
    %v1681 = vmul.f32 %v1637, %v1648
    %v1682 = vmul.f32 %v1638, %v1652
    %v1683 = vmul.f32 %v1639, %v1648
    %v1684 = vmul.f32 %v1640, %v1652
    %v1685 = vmul.f32 %v1641, %v1648
    %v1686 = vmul.f32 %v1642, %v1652
    %v1687 = vadd.f32 %v1655, %v1656
    %1688 = vadd.xlane.f32.xlu0 %v1687
    %v1689 = vpop.xlane.xlu0 %1688
    %v1690 = vadd.f32 %v1657, %v1658
    %1691 = vadd.xlane.f32.xlu0 %v1690
    %v1692 = vpop.xlane.xlu0 %1691
    %v1693 = vadd.f32 %v1659, %v1660
    %1694 = vadd.xlane.f32.xlu0 %v1693
    %v1695 = vpop.xlane.xlu0 %1694
    %v1696 = vadd.f32 %v1661, %v1662
    %1697 = vadd.xlane.f32.xlu0 %v1696
    %v1698 = vpop.xlane.xlu0 %1697
    %v1699 = vadd.f32 %v1663, %v1664
    %1700 = vadd.xlane.f32.xlu0 %v1699
    %v1701 = vpop.xlane.xlu0 %1700
    %v1702 = vadd.f32 %v1665, %v1666
    %1703 = vadd.xlane.f32.xlu0 %v1702
    %v1704 = vpop.xlane.xlu0 %1703
    %v1705 = vadd.f32 %v1667, %v1668
    %1706 = vadd.xlane.f32.xlu0 %v1705
    %v1707 = vpop.xlane.xlu0 %1706
    %v1708 = vadd.f32 %v1669, %v1670
    %1709 = vadd.xlane.f32.xlu0 %v1708
    %v1710 = vpop.xlane.xlu0 %1709
    %v1711 = vadd.f32 %v1671, %v1672
    %1712 = vadd.xlane.f32.xlu0 %v1711
    %v1713 = vpop.xlane.xlu0 %1712
    %v1714 = vadd.f32 %v1673, %v1674
    %1715 = vadd.xlane.f32.xlu0 %v1714
    %v1716 = vpop.xlane.xlu0 %1715
    %v1717 = vadd.f32 %v1675, %v1676
    %1718 = vadd.xlane.f32.xlu0 %v1717
    %v1719 = vpop.xlane.xlu0 %1718
    %v1720 = vadd.f32 %v1677, %v1678
    %1721 = vadd.xlane.f32.xlu0 %v1720
    %v1722 = vpop.xlane.xlu0 %1721
    %v1723 = vadd.f32 %v1679, %v1680
    %1724 = vadd.xlane.f32.xlu0 %v1723
    %v1725 = vpop.xlane.xlu0 %1724
    %v1726 = vadd.f32 %v1681, %v1682
    %1727 = vadd.xlane.f32.xlu0 %v1726
    %v1728 = vpop.xlane.xlu0 %1727
    %v1729 = vadd.f32 %v1683, %v1684
    %1730 = vadd.xlane.f32.xlu0 %v1729
    %v1731 = vpop.xlane.xlu0 %1730
    %v1732 = vadd.f32 %v1685, %v1686
    %1733 = vadd.xlane.f32.xlu0 %v1732
    %v1734 = vpop.xlane.xlu0 %1733
    %v1735 = vld [vmem:[#allocation2] sm:$0x1]
    %v1737 = vlaneseq
    %v1738 = vshrl.u32 %v1737, 7
    %v1739 = vsub.s32 0, %v1738
    %v1740 = vrot.slane %v1735, %v1739
    %v1742 = vadd.f32 %v1689, %v1740
    %v1743 = vadd.f32 %v1692, %v1740
    %v1744 = vadd.f32 %v1695, %v1740
    %v1745 = vadd.f32 %v1698, %v1740
    %v1746 = vadd.f32 %v1701, %v1740
    %v1747 = vadd.f32 %v1704, %v1740
    %v1748 = vadd.f32 %v1707, %v1740
    %v1749 = vadd.f32 %v1710, %v1740
    %v1750 = vadd.f32 %v1713, %v1740
    %v1751 = vadd.f32 %v1716, %v1740
    %v1752 = vadd.f32 %v1719, %v1740
    %v1753 = vadd.f32 %v1722, %v1740
    %v1754 = vadd.f32 %v1725, %v1740
    %v1755 = vadd.f32 %v1728, %v1740
    %v1756 = vadd.f32 %v1731, %v1740
    %v1757 = vadd.f32 %v1734, %v1740
    %vm1758 = vcmask 7168
    %1759 = vst.msk [vmem:[%s7] sm:$0xff] %vm1758, %v1742
    %1760 = vst.msk [vmem:[%s7 + $0x8] sm:$0xff] %vm1758, %v1743
    %1761 = vst.msk [vmem:[%s7 + $0x10] sm:$0xff] %vm1758, %v1744
    %1762 = vst.msk [vmem:[%s7 + $0x18] sm:$0xff] %vm1758, %v1745
    %1763 = vst.msk [vmem:[%s7 + $0x20] sm:$0xff] %vm1758, %v1746
    %1764 = vst.msk [vmem:[%s7 + $0x28] sm:$0xff] %vm1758, %v1747
    %1765 = vst.msk [vmem:[%s7 + $0x30] sm:$0xff] %vm1758, %v1748
    %1766 = vst.msk [vmem:[%s7 + $0x38] sm:$0xff] %vm1758, %v1749
    %1767 = vst.msk [vmem:[%s7 + $0x40] sm:$0xff] %vm1758, %v1750
    %1768 = vst.msk [vmem:[%s7 + $0x48] sm:$0xff] %vm1758, %v1751
    %1769 = vst.msk [vmem:[%s7 + $0x50] sm:$0xff] %vm1758, %v1752
    %1770 = vst.msk [vmem:[%s7 + $0x58] sm:$0xff] %vm1758, %v1753
    %1771 = vst.msk [vmem:[%s7 + $0x60] sm:$0xff] %vm1758, %v1754
    %1772 = vst.msk [vmem:[%s7 + $0x68] sm:$0xff] %vm1758, %v1755
    %1773 = vst.msk [vmem:[%s7 + $0x70] sm:$0xff] %vm1758, %v1756
    %1774 = vst.msk [vmem:[%s7 + $0x78] sm:$0xff] %vm1758, %v1757
    // Predicated region
    $region42: #{tpu_custom_call.1} parent=1 // pred_check
      _
    $region43: #{tpu_custom_call.1} parent=1 // pred_check_branch
      %1776 = sbr.rel (0) target = $region45
    $region44: #{tpu_custom_call.1} parent=1 // pred_region
      _
    $region45: #{tpu_custom_call.1} parent=1 // pred_fallthru
      _
    // Predicated region
    $region46: #{tpu_custom_call.1} parent=1 // pred_check
      _
    $region47: #{tpu_custom_call.1} parent=1 // pred_check_branch
      %1778 = sbr.rel (0) target = $region49
    $region48: #{tpu_custom_call.1} parent=1 // pred_region
      _
    $region49: #{tpu_custom_call.1} parent=1 // pred_fallthru
      _
    %1779 = vsyncpa [#allocation4], 1
    %1780 = vsyncpa [#allocation6], 1

</llo_original>
